<compile_context>
chip_gen: v5e
topology: v5e:2x2
jax: 0.10.0
libtpu: 0.0.40
codegen_flags: <defaults>
</compile_context>

<pallas_src>
import jax
import jax.numpy as jnp
from jax.experimental import pallas as pl
from jax.experimental.pallas import tpu as pltpu


# ----------------------------------------------------------------------------
# Pallas kernel: fused (depthwise 3x3 [BN-scale folded] -> +shift -> ReLU6 ->
# 1x1 conv) for BOTH heads of one feature level, one image per grid step.
# ----------------------------------------------------------------------------
def _fused_level_kernel(xpad_ref, cdw_ref, csh_ref, cpw_ref, cpb_ref,
                        rdw_ref, rsh_ref, rpw_ref, rpb_ref,
                        cls_out_ref, reg_out_ref):
    # xpad_ref : (1, H+2, W+2, C)  pre-padded feature map (one image)
    # cdw_ref  : (9, C)   cls depthwise 3x3 weights * BN scale, row = ky*3+kx
    # csh_ref  : (1, C)   cls folded BN shift
    # cpw_ref  : (C, CPc) cls 1x1 weight, zero-padded, bf16
    # cpb_ref  : (1, CPc) cls 1x1 bias, zero-padded, f32
    # rdw/rsh/rpw/rpb   : same for regression head (rpw stays f32)
    # cls_out_ref : (1, H*W, CPc)  lane-dense flat output slab
    # reg_out_ref : (1, H*W, CPr)
    _, HP, WP, C = xpad_ref.shape
    H, W = HP - 2, WP - 2

    xpad = xpad_ref[...].astype(jnp.float32)          # (1, H+2, W+2, C)

    def dw_bn_relu6(dw_ref, sh_ref):
        # Depthwise 3x3 conv (cross-correlation, stride 1, groups=C, no bias)
        # with the BN scale already folded into dw and the BN shift folded
        # into the first-tap accumulator init.  All f32 on the VPU.
        dw = dw_ref[...]                               # (9, C)
        sh = sh_ref[...].reshape(1, 1, 1, C)           # (1, 1, 1, C)
        acc = xpad[:, 0:H, 0:W, :] * dw[0:1, :].reshape(1, 1, 1, C) + sh
        for idx in range(1, 9):
            ky, kx = idx // 3, idx % 3
            w = dw[idx:idx + 1, :].reshape(1, 1, 1, C)
            acc = acc + xpad[:, ky:ky + H, kx:kx + W, :] * w
        y = jnp.clip(acc, 0.0, 6.0)                    # ReLU6
        return y.reshape(H * W, C)

    # Classification head: bf16 MXU operands, f32 accumulation.
    yc = dw_bn_relu6(cdw_ref, csh_ref)
    cls = jnp.dot(yc.astype(jnp.bfloat16), cpw_ref[...],
                  preferred_element_type=jnp.float32)
    cls_out_ref[0] = cls + cpb_ref[...]

    # Regression head: tiny matmul, kept in f32 (box deltas are sensitive).
    yr = dw_bn_relu6(rdw_ref, rsh_ref)
    reg = jnp.dot(yr, rpw_ref[...], preferred_element_type=jnp.float32)
    reg_out_ref[0] = reg + rpb_ref[...]


def _round_up(x, m):
    return ((x + m - 1) // m) * m


def fused_level_heads(x_nhwc, cls_p, reg_p):
    """Both SSDLite heads (cls + reg) on one feature level in one pallas_call.

    Returns (cls_out, reg_out) in NHWC: (N, H, W, Ccls), (N, H, W, Creg)."""
    N, H, W, C = x_nhwc.shape
    c_cls = cls_p["pww"].shape[1]
    c_reg = reg_p["pww"].shape[1]
    CPc = _round_up(c_cls, 128)     # per-head lane-dense padded widths
    CPr = _round_up(c_reg, 128)
    M = H * W

    # Pre-pad the feature map once (removes the in-kernel halo scratch copy).
    xpad = jnp.pad(x_nhwc.astype(jnp.float32), ((0, 0), (1, 1), (1, 1), (0, 0)))

    # Fold BN scale into the depthwise weights (host-side, once per level).
    cdw = cls_p["dww"] * cls_p["scale"]                        # (9, C)
    rdw = reg_p["dww"] * reg_p["scale"]
    csh, rsh = cls_p["shift"], reg_p["shift"]                  # (1, C)

    def pad_cols(a, cp):
        return jnp.pad(a, ((0, 0), (0, cp - a.shape[1])))

    cpw = pad_cols(cls_p["pww"], CPc).astype(jnp.bfloat16)     # (C, CPc)
    cpb = pad_cols(cls_p["pwb"], CPc)                          # (1, CPc)
    rpw = pad_cols(reg_p["pww"], CPr)                          # (C, CPr) f32
    rpb = pad_cols(reg_p["pwb"], CPr)                          # (1, CPr)

    # NOTE: per-image blocks keep VMEM in the few-MB range even for the real
    # SSDLite320 config (960 ch, 20x20).  On v5e, raise the 16 MiB default
    # scoped VMEM via pltpu.CompilerParams(vmem_limit_bytes=...) if needed;
    # the param blocks are grid-invariant and could be single-buffered
    # (pipeline_mode=pl.Buffered(1)) to save a copy of the big pww.
    cls_out, reg_out = pl.pallas_call(
        _fused_level_kernel,
        out_shape=(jax.ShapeDtypeStruct((N, M, CPc), jnp.float32),
                   jax.ShapeDtypeStruct((N, M, CPr), jnp.float32)),
        grid_spec=pltpu.PrefetchScalarGridSpec(
            num_scalar_prefetch=0,
            grid=(N,),                      # one image per step, both heads
            in_specs=[
                pl.BlockSpec((1, H + 2, W + 2, C), lambda i: (i, 0, 0, 0)),
                pl.BlockSpec((9, C), lambda i: (0, 0)),
                pl.BlockSpec((1, C), lambda i: (0, 0)),
                pl.BlockSpec((C, CPc), lambda i: (0, 0)),
                pl.BlockSpec((1, CPc), lambda i: (0, 0)),
                pl.BlockSpec((9, C), lambda i: (0, 0)),
                pl.BlockSpec((1, C), lambda i: (0, 0)),
                pl.BlockSpec((C, CPr), lambda i: (0, 0)),
                pl.BlockSpec((1, CPr), lambda i: (0, 0)),
            ],
            out_specs=[
                pl.BlockSpec((1, M, CPc), lambda i: (i, 0, 0)),
                pl.BlockSpec((1, M, CPr), lambda i: (i, 0, 0)),
            ],
        ),
        compiler_params=pltpu.CompilerParams(
            dimension_semantics=("parallel",)),   # balanced across v7x's 2 TCs
    )(xpad, cdw, csh, cpw, cpb, rdw, rsh, rpw, rpb)

    cls_nhwc = cls_out[:, :, :c_cls].reshape(N, H, W, c_cls)
    reg_nhwc = reg_out[:, :, :c_reg].reshape(N, H, W, c_reg)
    return cls_nhwc, reg_nhwc


# ----------------------------------------------------------------------------
# Parameter construction (deterministic, matches PyTorch module shapes/init).
# ----------------------------------------------------------------------------
def make_block_params(key, channels, out_channels, norm_eps):
    """Parameters for _prediction_block(channels, out_channels, 3, BN)."""
    k1, k2 = jax.random.split(key)
    # depthwise Conv2d(channels, channels, 3, groups=channels, bias=False),
    # init: normal(0, 0.03).  PyTorch weight (C,1,3,3) -> ours (9, C).
    dw_torch = 0.03 * jax.random.normal(k1, (channels, 1, 3, 3), jnp.float32)
    dww = jnp.transpose(dw_torch[:, 0, :, :], (1, 2, 0)).reshape(9, channels)
    # BatchNorm2d eval-mode: gamma=1, beta=0, running_mean=0, running_var=1.
    gamma = jnp.ones((channels,), jnp.float32)
    beta = jnp.zeros((channels,), jnp.float32)
    r_mean = jnp.zeros((channels,), jnp.float32)
    r_var = jnp.ones((channels,), jnp.float32)
    scale = gamma / jnp.sqrt(r_var + norm_eps)
    shift = beta - r_mean * scale
    # pointwise Conv2d(channels, out_channels, 1), normal(0,0.03), bias=0.
    pw_torch = 0.03 * jax.random.normal(k2, (out_channels, channels, 1, 1),
                                        jnp.float32)
    pww = jnp.transpose(pw_torch[:, :, 0, 0], (1, 0))  # (C, Cout)
    pwb = jnp.zeros((1, out_channels), jnp.float32)
    return {
        "dww": dww,
        "scale": scale.reshape(1, channels),
        "shift": shift.reshape(1, channels),
        "pww": pww,
        "pwb": pwb,
    }


# ----------------------------------------------------------------------------
# Pure-JAX reference for correctness checking (f32 throughout) and as the
# fallback path for tiny feature levels where kernel launch overhead dominates.
# ----------------------------------------------------------------------------
def prediction_block_ref(x_nhwc, p):
    C = x_nhwc.shape[-1]
    dw = p["dww"].reshape(3, 3, 1, C)
    y = jax.lax.conv_general_dilated(
        x_nhwc, dw, window_strides=(1, 1), padding="SAME",
        dimension_numbers=("NHWC", "HWIO", "NHWC"),
        feature_group_count=C)
    y = y * p["scale"].reshape(1, 1, 1, C) + p["shift"].reshape(1, 1, 1, C)
    y = jnp.clip(y, 0.0, 6.0)
    out = jnp.einsum("nhwc,cd->nhwd", y, p["pww"]) + p["pwb"].reshape(1, 1, 1, -1)
    return out


# ----------------------------------------------------------------------------
# SSDLiteHead forward (reshape/concat glue, plain JAX).
# ----------------------------------------------------------------------------
_MIN_PIXELS_FOR_PALLAS = 64   # below this M, launch/step overhead > compute


def ssdlite_head_forward(features_nhwc, cls_params, reg_params, num_classes):
    cls_all, reg_all = [], []
    for x, cp, rp in zip(features_nhwc, cls_params, reg_params):
        N, H, W, _ = x.shape
        if H * W >= _MIN_PIXELS_FOR_PALLAS:
            cls_o, reg_o = fused_level_heads(x, cp, rp)   # Pallas, NHWC
        else:
            # tiny map: a few hundred ns of work -> leave in plain XLA
            cls_o = prediction_block_ref(x, cp)
            reg_o = prediction_block_ref(x, rp)
        c_cls = cls_o.shape[-1]
        A = c_cls // num_classes
        # PyTorch: (N, A*K, H, W) -> view (N,A,K,H,W) -> permute (N,H,W,A,K)
        #          -> reshape (N, H*W*A, K).  In NHWC this is a pure reshape.
        cls_all.append(cls_o.reshape(N, H * W * A, num_classes))
        reg_all.append(reg_o.reshape(N, H * W * A, 4))
    return {
        "bbox_regression": jnp.concatenate(reg_all, axis=1),
        "cls_logits": jnp.concatenate(cls_all, axis=1),
    }


# ----------------------------------------------------------------------------
# Main
# ----------------------------------------------------------------------------
if __name__ == "__main__":
    key = jax.random.PRNGKey(0)

    # Small SSDLite-head configuration (module uses 6 levels with channels
    # [960,512,256,256,256,128] and 6 anchors/location; scaled down here).
    in_channels = [128, 64, 32]
    spatial = [(8, 8), (4, 4), (2, 2)]
    num_anchors = [6, 6, 6]
    num_classes = 5
    norm_eps = 1e-3
    N = 2

    # synthetic backbone feature maps (NCHW like PyTorch, converted to NHWC)
    feat_keys = jax.random.split(key, len(in_channels) + 1)
    features_nchw = [
        jax.random.normal(feat_keys[i], (N, c, h, w), jnp.float32)
        for i, (c, (h, w)) in enumerate(zip(in_channels, spatial))
    ]
    features_nhwc = [jnp.transpose(f, (0, 2, 3, 1)) for f in features_nchw]

    # head parameters (deterministic init mirroring _normal_init)
    pkey = feat_keys[-1]
    level_keys = jax.random.split(pkey, 2 * len(in_channels))
    cls_params = [
        make_block_params(level_keys[i], c, num_classes * a, norm_eps)
        for i, (c, a) in enumerate(zip(in_channels, num_anchors))
    ]
    reg_params = [
        make_block_params(level_keys[len(in_channels) + i], c, 4 * a, norm_eps)
        for i, (c, a) in enumerate(zip(in_channels, num_anchors))
    ]

    head_out = ssdlite_head_forward(features_nhwc, cls_params, reg_params,
                                    num_classes)
    jax.block_until_ready(head_out)

    # shape checks (anchors = sum_i H_i*W_i*A_i)
    total_anchors = sum(h * w * a for (h, w), a in zip(spatial, num_anchors))
    assert head_out["bbox_regression"].shape == (N, total_anchors, 4)
    assert head_out["cls_logits"].shape == (N, total_anchors, num_classes)

    # numerical check of the fused Pallas prediction block against a pure-JAX
    # reference on every level (cls head uses bf16 MXU operands -> slightly
    # looser tolerance; reg head is f32 end-to-end).
    for x, cp, rp in zip(features_nhwc, cls_params, reg_params):
        cls_got, reg_got = fused_level_heads(x, cp, rp)
        cls_want = prediction_block_ref(x, cp)
        reg_want = prediction_block_ref(x, rp)
        assert jnp.allclose(cls_got, cls_want, rtol=3e-2, atol=3e-3), "cls mismatch"
        assert jnp.allclose(reg_got, reg_want, rtol=1e-3, atol=1e-4), "reg mismatch"

    print("KERNEL_OK")
</pallas_src>

<mosaic_0001>
module attributes {stable_mosaic.version = 11 : i64} {
  func.func @_fused_level_kernel(%arg0: i32, %arg1: memref<1x10x10x128xf32, #tpu.memory_space<vmem>>, %arg2: memref<9x128xf32, #tpu.memory_space<vmem>>, %arg3: memref<1x128xf32, #tpu.memory_space<vmem>>, %arg4: memref<128x128xbf16, #tpu.memory_space<vmem>>, %arg5: memref<1x128xf32, #tpu.memory_space<vmem>>, %arg6: memref<9x128xf32, #tpu.memory_space<vmem>>, %arg7: memref<1x128xf32, #tpu.memory_space<vmem>>, %arg8: memref<128x128xf32, #tpu.memory_space<vmem>>, %arg9: memref<1x128xf32, #tpu.memory_space<vmem>>, %arg10: memref<1x64x128xf32, #tpu.memory_space<vmem>>, %arg11: memref<1x64x128xf32, #tpu.memory_space<vmem>>) attributes {dimension_semantics = [#tpu.dimension_semantics<parallel>], iteration_bounds = array<i64: 2>, scalar_prefetch = 0 : i64, scratch_operands = 0 : i64, tpu.core_type = #tpu.core_type<tc>, window_params = [{transform_indices = @transform_0, window_bounds = array<i64: 1, 10, 10, 128>}, {pipeline_mode = #tpu.pipeline_mode<synchronous>, transform_indices = @transform_1, window_bounds = array<i64: 9, 128>}, {pipeline_mode = #tpu.pipeline_mode<synchronous>, transform_indices = @transform_2, window_bounds = array<i64: 1, 128>}, {pipeline_mode = #tpu.pipeline_mode<synchronous>, transform_indices = @transform_3, window_bounds = array<i64: 128, 128>}, {pipeline_mode = #tpu.pipeline_mode<synchronous>, transform_indices = @transform_4, window_bounds = array<i64: 1, 128>}, {pipeline_mode = #tpu.pipeline_mode<synchronous>, transform_indices = @transform_5, window_bounds = array<i64: 9, 128>}, {pipeline_mode = #tpu.pipeline_mode<synchronous>, transform_indices = @transform_6, window_bounds = array<i64: 1, 128>}, {pipeline_mode = #tpu.pipeline_mode<synchronous>, transform_indices = @transform_7, window_bounds = array<i64: 128, 128>}, {pipeline_mode = #tpu.pipeline_mode<synchronous>, transform_indices = @transform_8, window_bounds = array<i64: 1, 128>}, {transform_indices = @transform_9, window_bounds = array<i64: 1, 64, 128>}, {transform_indices = @transform_10, window_bounds = array<i64: 1, 64, 128>}]} {
    %c0 = arith.constant 0 : index
    %c0_0 = arith.constant 0 : index
    %c0_1 = arith.constant 0 : index
    %c0_2 = arith.constant 0 : index
    %0 = vector.load %arg1[%c0, %c0_0, %c0_1, %c0_2] : memref<1x10x10x128xf32, #tpu.memory_space<vmem>>, vector<1x10x10x128xf32>
    %c0_3 = arith.constant 0 : index
    %c0_4 = arith.constant 0 : index
    %1 = vector.load %arg2[%c0_3, %c0_4] : memref<9x128xf32, #tpu.memory_space<vmem>>, vector<9x128xf32>
    %c0_5 = arith.constant 0 : index
    %c0_6 = arith.constant 0 : index
    %2 = vector.load %arg3[%c0_5, %c0_6] : memref<1x128xf32, #tpu.memory_space<vmem>>, vector<1x128xf32>
    %3 = vector.shape_cast %2 : vector<1x128xf32> to vector<1x1x1x128xf32>
    %4 = vector.extract_strided_slice %0 {offsets = [0, 0, 0, 0], sizes = [1, 8, 8, 128], strides = [1, 1, 1, 1]} : vector<1x10x10x128xf32> to vector<1x8x8x128xf32>
    %5 = vector.extract_strided_slice %1 {offsets = [0, 0], sizes = [1, 128], strides = [1, 1]} : vector<9x128xf32> to vector<1x128xf32>
    %6 = vector.shape_cast %5 : vector<1x128xf32> to vector<1x1x1x128xf32>
    %7 = vector.broadcast %6 : vector<1x1x1x128xf32> to vector<1x8x8x128xf32>
    %8 = arith.mulf %4, %7 : vector<1x8x8x128xf32>
    %9 = vector.broadcast %3 : vector<1x1x1x128xf32> to vector<1x8x8x128xf32>
    %10 = arith.addf %8, %9 : vector<1x8x8x128xf32>
    %11 = vector.extract_strided_slice %1 {offsets = [1, 0], sizes = [1, 128], strides = [1, 1]} : vector<9x128xf32> to vector<1x128xf32>
    %12 = vector.shape_cast %11 : vector<1x128xf32> to vector<1x1x1x128xf32>
    %13 = vector.extract_strided_slice %0 {offsets = [0, 0, 1, 0], sizes = [1, 8, 8, 128], strides = [1, 1, 1, 1]} : vector<1x10x10x128xf32> to vector<1x8x8x128xf32>
    %14 = vector.broadcast %12 : vector<1x1x1x128xf32> to vector<1x8x8x128xf32>
    %15 = arith.mulf %13, %14 : vector<1x8x8x128xf32>
    %16 = arith.addf %10, %15 : vector<1x8x8x128xf32>
    %17 = vector.extract_strided_slice %1 {offsets = [2, 0], sizes = [1, 128], strides = [1, 1]} : vector<9x128xf32> to vector<1x128xf32>
    %18 = vector.shape_cast %17 : vector<1x128xf32> to vector<1x1x1x128xf32>
    %19 = vector.extract_strided_slice %0 {offsets = [0, 0, 2, 0], sizes = [1, 8, 8, 128], strides = [1, 1, 1, 1]} : vector<1x10x10x128xf32> to vector<1x8x8x128xf32>
    %20 = vector.broadcast %18 : vector<1x1x1x128xf32> to vector<1x8x8x128xf32>
    %21 = arith.mulf %19, %20 : vector<1x8x8x128xf32>
    %22 = arith.addf %16, %21 : vector<1x8x8x128xf32>
    %23 = vector.extract_strided_slice %1 {offsets = [3, 0], sizes = [1, 128], strides = [1, 1]} : vector<9x128xf32> to vector<1x128xf32>
    %24 = vector.shape_cast %23 : vector<1x128xf32> to vector<1x1x1x128xf32>
    %25 = vector.extract_strided_slice %0 {offsets = [0, 1, 0, 0], sizes = [1, 8, 8, 128], strides = [1, 1, 1, 1]} : vector<1x10x10x128xf32> to vector<1x8x8x128xf32>
    %26 = vector.broadcast %24 : vector<1x1x1x128xf32> to vector<1x8x8x128xf32>
    %27 = arith.mulf %25, %26 : vector<1x8x8x128xf32>
    %28 = arith.addf %22, %27 : vector<1x8x8x128xf32>
    %29 = vector.extract_strided_slice %1 {offsets = [4, 0], sizes = [1, 128], strides = [1, 1]} : vector<9x128xf32> to vector<1x128xf32>
    %30 = vector.shape_cast %29 : vector<1x128xf32> to vector<1x1x1x128xf32>
    %31 = vector.extract_strided_slice %0 {offsets = [0, 1, 1, 0], sizes = [1, 8, 8, 128], strides = [1, 1, 1, 1]} : vector<1x10x10x128xf32> to vector<1x8x8x128xf32>
    %32 = vector.broadcast %30 : vector<1x1x1x128xf32> to vector<1x8x8x128xf32>
    %33 = arith.mulf %31, %32 : vector<1x8x8x128xf32>
    %34 = arith.addf %28, %33 : vector<1x8x8x128xf32>
    %35 = vector.extract_strided_slice %1 {offsets = [5, 0], sizes = [1, 128], strides = [1, 1]} : vector<9x128xf32> to vector<1x128xf32>
    %36 = vector.shape_cast %35 : vector<1x128xf32> to vector<1x1x1x128xf32>
    %37 = vector.extract_strided_slice %0 {offsets = [0, 1, 2, 0], sizes = [1, 8, 8, 128], strides = [1, 1, 1, 1]} : vector<1x10x10x128xf32> to vector<1x8x8x128xf32>
    %38 = vector.broadcast %36 : vector<1x1x1x128xf32> to vector<1x8x8x128xf32>
    %39 = arith.mulf %37, %38 : vector<1x8x8x128xf32>
    %40 = arith.addf %34, %39 : vector<1x8x8x128xf32>
    %41 = vector.extract_strided_slice %1 {offsets = [6, 0], sizes = [1, 128], strides = [1, 1]} : vector<9x128xf32> to vector<1x128xf32>
    %42 = vector.shape_cast %41 : vector<1x128xf32> to vector<1x1x1x128xf32>
    %43 = vector.extract_strided_slice %0 {offsets = [0, 2, 0, 0], sizes = [1, 8, 8, 128], strides = [1, 1, 1, 1]} : vector<1x10x10x128xf32> to vector<1x8x8x128xf32>
    %44 = vector.broadcast %42 : vector<1x1x1x128xf32> to vector<1x8x8x128xf32>
    %45 = arith.mulf %43, %44 : vector<1x8x8x128xf32>
    %46 = arith.addf %40, %45 : vector<1x8x8x128xf32>
    %47 = vector.extract_strided_slice %1 {offsets = [7, 0], sizes = [1, 128], strides = [1, 1]} : vector<9x128xf32> to vector<1x128xf32>
    %48 = vector.shape_cast %47 : vector<1x128xf32> to vector<1x1x1x128xf32>
    %49 = vector.extract_strided_slice %0 {offsets = [0, 2, 1, 0], sizes = [1, 8, 8, 128], strides = [1, 1, 1, 1]} : vector<1x10x10x128xf32> to vector<1x8x8x128xf32>
    %50 = vector.broadcast %48 : vector<1x1x1x128xf32> to vector<1x8x8x128xf32>
    %51 = arith.mulf %49, %50 : vector<1x8x8x128xf32>
    %52 = arith.addf %46, %51 : vector<1x8x8x128xf32>
    %53 = vector.extract_strided_slice %1 {offsets = [8, 0], sizes = [1, 128], strides = [1, 1]} : vector<9x128xf32> to vector<1x128xf32>
    %54 = vector.shape_cast %53 : vector<1x128xf32> to vector<1x1x1x128xf32>
    %55 = vector.extract_strided_slice %0 {offsets = [0, 2, 2, 0], sizes = [1, 8, 8, 128], strides = [1, 1, 1, 1]} : vector<1x10x10x128xf32> to vector<1x8x8x128xf32>
    %56 = vector.broadcast %54 : vector<1x1x1x128xf32> to vector<1x8x8x128xf32>
    %57 = arith.mulf %55, %56 : vector<1x8x8x128xf32>
    %58 = arith.addf %52, %57 : vector<1x8x8x128xf32>
    %cst = arith.constant 0.000000e+00 : f32
    %cst_7 = arith.constant 6.000000e+00 : f32
    %59 = vector.broadcast %cst : f32 to vector<1x8x8x128xf32>
    %60 = arith.maximumf %59, %58 : vector<1x8x8x128xf32>
    %61 = vector.broadcast %cst_7 : f32 to vector<1x8x8x128xf32>
    %62 = arith.minimumf %61, %60 : vector<1x8x8x128xf32>
    %63 = vector.shape_cast %62 : vector<1x8x8x128xf32> to vector<64x128xf32>
    %64 = arith.truncf %63 : vector<64x128xf32> to vector<64x128xbf16>
    %c0_8 = arith.constant 0 : index
    %c0_9 = arith.constant 0 : index
    %65 = vector.load %arg4[%c0_8, %c0_9] : memref<128x128xbf16, #tpu.memory_space<vmem>>, vector<128x128xbf16>
    %cst_10 = arith.constant dense<0.000000e+00> : vector<64x128xf32>
    %66 = tpu.matmul %64, %65, %cst_10 {dimension_numbers = #tpu.dot_dimension_numbers<[1], [0], [0], [1], [0, 0, 1, 1], [], []>} : vector<64x128xbf16>, vector<128x128xbf16>, vector<64x128xf32> -> vector<64x128xf32>
    %c0_11 = arith.constant 0 : index
    %c0_12 = arith.constant 0 : index
    %67 = vector.load %arg5[%c0_11, %c0_12] : memref<1x128xf32, #tpu.memory_space<vmem>>, vector<1x128xf32>
    %68 = vector.broadcast %67 : vector<1x128xf32> to vector<64x128xf32>
    %69 = arith.addf %66, %68 : vector<64x128xf32>
    %c0_13 = arith.constant 0 : index
    %c0_14 = arith.constant 0 : index
    %c0_15 = arith.constant 0 : index
    %70 = vector.load %arg10[%c0_13, %c0_14, %c0_15] : memref<1x64x128xf32, #tpu.memory_space<vmem>>, vector<1x64x128xf32>
    %71 = vector.shape_cast %70 : vector<1x64x128xf32> to vector<64x128xf32>
    %72 = vector.shape_cast %69 : vector<64x128xf32> to vector<1x64x128xf32>
    tpu.vector_store %arg10[%c0_13, %c0_14, %c0_15], %72 {strides = array<i32>} : memref<1x64x128xf32, #tpu.memory_space<vmem>>, vector<1x64x128xf32>,
    %c0_16 = arith.constant 0 : index
    %c0_17 = arith.constant 0 : index
    %73 = vector.load %arg6[%c0_16, %c0_17] : memref<9x128xf32, #tpu.memory_space<vmem>>, vector<9x128xf32>
    %c0_18 = arith.constant 0 : index
    %c0_19 = arith.constant 0 : index
    %74 = vector.load %arg7[%c0_18, %c0_19] : memref<1x128xf32, #tpu.memory_space<vmem>>, vector<1x128xf32>
    %75 = vector.shape_cast %74 : vector<1x128xf32> to vector<1x1x1x128xf32>
    %76 = vector.extract_strided_slice %0 {offsets = [0, 0, 0, 0], sizes = [1, 8, 8, 128], strides = [1, 1, 1, 1]} : vector<1x10x10x128xf32> to vector<1x8x8x128xf32>
    %77 = vector.extract_strided_slice %73 {offsets = [0, 0], sizes = [1, 128], strides = [1, 1]} : vector<9x128xf32> to vector<1x128xf32>
    %78 = vector.shape_cast %77 : vector<1x128xf32> to vector<1x1x1x128xf32>
    %79 = vector.broadcast %78 : vector<1x1x1x128xf32> to vector<1x8x8x128xf32>
    %80 = arith.mulf %76, %79 : vector<1x8x8x128xf32>
    %81 = vector.broadcast %75 : vector<1x1x1x128xf32> to vector<1x8x8x128xf32>
    %82 = arith.addf %80, %81 : vector<1x8x8x128xf32>
    %83 = vector.extract_strided_slice %73 {offsets = [1, 0], sizes = [1, 128], strides = [1, 1]} : vector<9x128xf32> to vector<1x128xf32>
    %84 = vector.shape_cast %83 : vector<1x128xf32> to vector<1x1x1x128xf32>
    %85 = vector.extract_strided_slice %0 {offsets = [0, 0, 1, 0], sizes = [1, 8, 8, 128], strides = [1, 1, 1, 1]} : vector<1x10x10x128xf32> to vector<1x8x8x128xf32>
    %86 = vector.broadcast %84 : vector<1x1x1x128xf32> to vector<1x8x8x128xf32>
    %87 = arith.mulf %85, %86 : vector<1x8x8x128xf32>
    %88 = arith.addf %82, %87 : vector<1x8x8x128xf32>
    %89 = vector.extract_strided_slice %73 {offsets = [2, 0], sizes = [1, 128], strides = [1, 1]} : vector<9x128xf32> to vector<1x128xf32>
    %90 = vector.shape_cast %89 : vector<1x128xf32> to vector<1x1x1x128xf32>
    %91 = vector.extract_strided_slice %0 {offsets = [0, 0, 2, 0], sizes = [1, 8, 8, 128], strides = [1, 1, 1, 1]} : vector<1x10x10x128xf32> to vector<1x8x8x128xf32>
    %92 = vector.broadcast %90 : vector<1x1x1x128xf32> to vector<1x8x8x128xf32>
    %93 = arith.mulf %91, %92 : vector<1x8x8x128xf32>
    %94 = arith.addf %88, %93 : vector<1x8x8x128xf32>
    %95 = vector.extract_strided_slice %73 {offsets = [3, 0], sizes = [1, 128], strides = [1, 1]} : vector<9x128xf32> to vector<1x128xf32>
    %96 = vector.shape_cast %95 : vector<1x128xf32> to vector<1x1x1x128xf32>
    %97 = vector.extract_strided_slice %0 {offsets = [0, 1, 0, 0], sizes = [1, 8, 8, 128], strides = [1, 1, 1, 1]} : vector<1x10x10x128xf32> to vector<1x8x8x128xf32>
    %98 = vector.broadcast %96 : vector<1x1x1x128xf32> to vector<1x8x8x128xf32>
    %99 = arith.mulf %97, %98 : vector<1x8x8x128xf32>
    %100 = arith.addf %94, %99 : vector<1x8x8x128xf32>
    %101 = vector.extract_strided_slice %73 {offsets = [4, 0], sizes = [1, 128], strides = [1, 1]} : vector<9x128xf32> to vector<1x128xf32>
    %102 = vector.shape_cast %101 : vector<1x128xf32> to vector<1x1x1x128xf32>
    %103 = vector.extract_strided_slice %0 {offsets = [0, 1, 1, 0], sizes = [1, 8, 8, 128], strides = [1, 1, 1, 1]} : vector<1x10x10x128xf32> to vector<1x8x8x128xf32>
    %104 = vector.broadcast %102 : vector<1x1x1x128xf32> to vector<1x8x8x128xf32>
    %105 = arith.mulf %103, %104 : vector<1x8x8x128xf32>
    %106 = arith.addf %100, %105 : vector<1x8x8x128xf32>
    %107 = vector.extract_strided_slice %73 {offsets = [5, 0], sizes = [1, 128], strides = [1, 1]} : vector<9x128xf32> to vector<1x128xf32>
    %108 = vector.shape_cast %107 : vector<1x128xf32> to vector<1x1x1x128xf32>
    %109 = vector.extract_strided_slice %0 {offsets = [0, 1, 2, 0], sizes = [1, 8, 8, 128], strides = [1, 1, 1, 1]} : vector<1x10x10x128xf32> to vector<1x8x8x128xf32>
    %110 = vector.broadcast %108 : vector<1x1x1x128xf32> to vector<1x8x8x128xf32>
    %111 = arith.mulf %109, %110 : vector<1x8x8x128xf32>
    %112 = arith.addf %106, %111 : vector<1x8x8x128xf32>
    %113 = vector.extract_strided_slice %73 {offsets = [6, 0], sizes = [1, 128], strides = [1, 1]} : vector<9x128xf32> to vector<1x128xf32>
    %114 = vector.shape_cast %113 : vector<1x128xf32> to vector<1x1x1x128xf32>
    %115 = vector.extract_strided_slice %0 {offsets = [0, 2, 0, 0], sizes = [1, 8, 8, 128], strides = [1, 1, 1, 1]} : vector<1x10x10x128xf32> to vector<1x8x8x128xf32>
    %116 = vector.broadcast %114 : vector<1x1x1x128xf32> to vector<1x8x8x128xf32>
    %117 = arith.mulf %115, %116 : vector<1x8x8x128xf32>
    %118 = arith.addf %112, %117 : vector<1x8x8x128xf32>
    %119 = vector.extract_strided_slice %73 {offsets = [7, 0], sizes = [1, 128], strides = [1, 1]} : vector<9x128xf32> to vector<1x128xf32>
    %120 = vector.shape_cast %119 : vector<1x128xf32> to vector<1x1x1x128xf32>
    %121 = vector.extract_strided_slice %0 {offsets = [0, 2, 1, 0], sizes = [1, 8, 8, 128], strides = [1, 1, 1, 1]} : vector<1x10x10x128xf32> to vector<1x8x8x128xf32>
    %122 = vector.broadcast %120 : vector<1x1x1x128xf32> to vector<1x8x8x128xf32>
    %123 = arith.mulf %121, %122 : vector<1x8x8x128xf32>
    %124 = arith.addf %118, %123 : vector<1x8x8x128xf32>
    %125 = vector.extract_strided_slice %73 {offsets = [8, 0], sizes = [1, 128], strides = [1, 1]} : vector<9x128xf32> to vector<1x128xf32>
    %126 = vector.shape_cast %125 : vector<1x128xf32> to vector<1x1x1x128xf32>
    %127 = vector.extract_strided_slice %0 {offsets = [0, 2, 2, 0], sizes = [1, 8, 8, 128], strides = [1, 1, 1, 1]} : vector<1x10x10x128xf32> to vector<1x8x8x128xf32>
    %128 = vector.broadcast %126 : vector<1x1x1x128xf32> to vector<1x8x8x128xf32>
    %129 = arith.mulf %127, %128 : vector<1x8x8x128xf32>
    %130 = arith.addf %124, %129 : vector<1x8x8x128xf32>
    %cst_20 = arith.constant 0.000000e+00 : f32
    %cst_21 = arith.constant 6.000000e+00 : f32
    %131 = vector.broadcast %cst_20 : f32 to vector<1x8x8x128xf32>
    %132 = arith.maximumf %131, %130 : vector<1x8x8x128xf32>
    %133 = vector.broadcast %cst_21 : f32 to vector<1x8x8x128xf32>
    %134 = arith.minimumf %133, %132 : vector<1x8x8x128xf32>
    %135 = vector.shape_cast %134 : vector<1x8x8x128xf32> to vector<64x128xf32>
    %c0_22 = arith.constant 0 : index
    %c0_23 = arith.constant 0 : index
    %136 = vector.load %arg8[%c0_22, %c0_23] : memref<128x128xf32, #tpu.memory_space<vmem>>, vector<128x128xf32>
    %cst_24 = arith.constant dense<0.000000e+00> : vector<64x128xf32>
    %137 = tpu.matmul %135, %136, %cst_24 {dimension_numbers = #tpu.dot_dimension_numbers<[1], [0], [0], [1], [0, 0, 1, 1], [], []>} : vector<64x128xf32>, vector<128x128xf32>, vector<64x128xf32> -> vector<64x128xf32>
    %c0_25 = arith.constant 0 : index
    %c0_26 = arith.constant 0 : index
    %138 = vector.load %arg9[%c0_25, %c0_26] : memref<1x128xf32, #tpu.memory_space<vmem>>, vector<1x128xf32>
    %139 = vector.broadcast %138 : vector<1x128xf32> to vector<64x128xf32>
    %140 = arith.addf %137, %139 : vector<64x128xf32>
    %c0_27 = arith.constant 0 : index
    %c0_28 = arith.constant 0 : index
    %c0_29 = arith.constant 0 : index
    %141 = vector.load %arg11[%c0_27, %c0_28, %c0_29] : memref<1x64x128xf32, #tpu.memory_space<vmem>>, vector<1x64x128xf32>
    %142 = vector.shape_cast %141 : vector<1x64x128xf32> to vector<64x128xf32>
    %143 = vector.shape_cast %140 : vector<64x128xf32> to vector<1x64x128xf32>
    tpu.vector_store %arg11[%c0_27, %c0_28, %c0_29], %143 {strides = array<i32>} : memref<1x64x128xf32, #tpu.memory_space<vmem>>, vector<1x64x128xf32>,
    return
  }
  func.func @transform_0(%arg0: i32) -> (i32, i32, i32, i32) {
    %c0_i32 = arith.constant 0 : i32
    %c0_i32_0 = arith.constant 0 : i32
    %c0_i32_1 = arith.constant 0 : i32
    %c0_i32_2 = arith.constant 0 : i32
    return %arg0, %c0_i32, %c0_i32_0, %c0_i32_1 : i32, i32, i32, i32
  }
  func.func @transform_1(%arg0: i32) -> (i32, i32) {
    %c0_i32 = arith.constant 0 : i32
    %c0_i32_0 = arith.constant 0 : i32
    %c0_i32_1 = arith.constant 0 : i32
    return %c0_i32, %c0_i32_0 : i32, i32
  }
  func.func @transform_2(%arg0: i32) -> (i32, i32) {
    %c0_i32 = arith.constant 0 : i32
    %c0_i32_0 = arith.constant 0 : i32
    %c0_i32_1 = arith.constant 0 : i32
    return %c0_i32, %c0_i32_0 : i32, i32
  }
  func.func @transform_3(%arg0: i32) -> (i32, i32) {
    %c0_i32 = arith.constant 0 : i32
    %c0_i32_0 = arith.constant 0 : i32
    %c0_i32_1 = arith.constant 0 : i32
    return %c0_i32, %c0_i32_0 : i32, i32
  }
  func.func @transform_4(%arg0: i32) -> (i32, i32) {
    %c0_i32 = arith.constant 0 : i32
    %c0_i32_0 = arith.constant 0 : i32
    %c0_i32_1 = arith.constant 0 : i32
    return %c0_i32, %c0_i32_0 : i32, i32
  }
  func.func @transform_5(%arg0: i32) -> (i32, i32) {
    %c0_i32 = arith.constant 0 : i32
    %c0_i32_0 = arith.constant 0 : i32
    %c0_i32_1 = arith.constant 0 : i32
    return %c0_i32, %c0_i32_0 : i32, i32
  }
  func.func @transform_6(%arg0: i32) -> (i32, i32) {
    %c0_i32 = arith.constant 0 : i32
    %c0_i32_0 = arith.constant 0 : i32
    %c0_i32_1 = arith.constant 0 : i32
    return %c0_i32, %c0_i32_0 : i32, i32
  }
  func.func @transform_7(%arg0: i32) -> (i32, i32) {
    %c0_i32 = arith.constant 0 : i32
    %c0_i32_0 = arith.constant 0 : i32
    %c0_i32_1 = arith.constant 0 : i32
    return %c0_i32, %c0_i32_0 : i32, i32
  }
  func.func @transform_8(%arg0: i32) -> (i32, i32) {
    %c0_i32 = arith.constant 0 : i32
    %c0_i32_0 = arith.constant 0 : i32
    %c0_i32_1 = arith.constant 0 : i32
    return %c0_i32, %c0_i32_0 : i32, i32
  }
  func.func @transform_9(%arg0: i32) -> (i32, i32, i32) {
    %c0_i32 = arith.constant 0 : i32
    %c0_i32_0 = arith.constant 0 : i32
    %c0_i32_1 = arith.constant 0 : i32
    return %arg0, %c0_i32, %c0_i32_0 : i32, i32, i32
  }
  func.func @transform_10(%arg0: i32) -> (i32, i32, i32) {
    %c0_i32 = arith.constant 0 : i32
    %c0_i32_0 = arith.constant 0 : i32
    %c0_i32_1 = arith.constant 0 : i32
    return %arg0, %c0_i32, %c0_i32_0 : i32, i32, i32
  }
}

</mosaic_0001>

<llo_original>
// kernel: tpu_custom_call.1
$region0: #{tpu_custom_call.1}
  #allocation0 [shape = 'u32[]', space=smem, size = 0x4, offset = 0x4, fixed_abs, tag = 'smem constant byte address 0x4 - core index']
  #allocation1 [shape = 'u32[72,128]{1,0:T(1,128)}', space=vmem, size = 0x9000, scoped, tag = 'internal scratch']
  %s0 = inlined_call_operand.vmem [shape: f32[2,10,10,128], index: 0, kind: input, shape index: {}]
  %s1 = inlined_call_operand.vmem [shape: f32[9,128], index: 1, kind: input, shape index: {}]
  %s2 = inlined_call_operand.vmem [shape: f32[1,128], index: 2, kind: input, shape index: {}]
  %s3 = inlined_call_operand.vmem [shape: bf16[128,128], index: 3, kind: input, shape index: {}]
  %s4 = inlined_call_operand.vmem [shape: f32[1,128], index: 4, kind: input, shape index: {}]
  %s5 = inlined_call_operand.vmem [shape: f32[9,128], index: 5, kind: input, shape index: {}]
  %s6 = inlined_call_operand.vmem [shape: f32[1,128], index: 6, kind: input, shape index: {}]
  %s7 = inlined_call_operand.vmem [shape: f32[128,128], index: 7, kind: input, shape index: {}]
  %s8 = inlined_call_operand.vmem [shape: f32[1,128], index: 8, kind: input, shape index: {}]
  %s9 = inlined_call_operand.hbm [shape: f32[2,64,128], index: 9, kind: output, shape index: {0}]
  %s10 = inlined_call_operand.hbm [shape: f32[2,64,128], index: 10, kind: output, shape index: {1}]
  %11 = xla_tuple %s9, %s10
  %s12 = sld [smem:[#allocation0]]
  $region77: #{tpu_custom_call.1} parent=0
    _
  %s14 = ssub.s32 1, %s12
  %s15 = scalar_select 0, %s14, %s12
  $region1: #{tpu_custom_call.1} parent=0
    #allocation2 [shape = 'u8[65536]{0}', space=vmem, size = 0x10000, scoped, tag = 'output window, operand 0']
    #allocation3 [shape = 's32[2]{0}', space=sflag, size = 0x8, scoped, tag = 'scoped memory for tpu_custom_call.1']
    #allocation4 [shape = 'u8[65536]{0}', space=vmem, size = 0x10000, scoped, tag = 'output window, operand 1']
    #allocation5 [shape = 's32[2]{0}', space=sflag, size = 0x8, scoped, tag = 'scoped memory for tpu_custom_call.1']
    %16 = vsyncpa [#allocation3], 0
    %s17 = scalar_lea.sflag [#allocation3], 1
    %18 = vsyncpa %s17, 0
    %19 = vsyncpa [#allocation5], 0
    %s20 = scalar_lea.sflag [#allocation5], 1
    %21 = vsyncpa %s20, 0
    loop: start=0, step=1, limit=4
    $region2: #{tpu_custom_call.1} parent=1 // loop_pre_header
      _
    $region3: #{tpu_custom_call.1} parent=1 // loop_header
      %s23 = sphi 0, %s27
      %p24 = scmp.ge.s32.totalorder %s23, 4
      %s33 = sphi 0, %s35
      %s36 = sphi 0, %s33
      %s37 = sphi 0, %s36
      %s53 = sphi 0, %s37
      %s57 = sphi 0, %s57
      %s59 = sphi 0, %s57
      %s60 = sphi 0, %s59
      %s74 = sphi 0, %s60
      %s78 = sphi 0, %s78
      %s80 = sphi 0, %s78
      %s81 = sphi 0, %s80
      %s95 = sphi 0, %s81
      %s99 = sphi 0, %s99
      %s101 = sphi 0, %s99
      %s102 = sphi 0, %s101
      %s116 = sphi 0, %s102
      %s120 = sphi 0, %s120
      %s122 = sphi 0, %s120
      %s123 = sphi 0, %s122
      %s137 = sphi 0, %s123
      %s141 = sphi 0, %s141
      %s143 = sphi 0, %s141
      %s144 = sphi 0, %s143
      %s158 = sphi 0, %s144
      %s162 = sphi 0, %s162
      %s164 = sphi 0, %s162
      %s165 = sphi 0, %s164
      %s179 = sphi 0, %s165
      %s183 = sphi 0, %s183
      %s185 = sphi 0, %s183
      %s186 = sphi 0, %s185
      %s200 = sphi 0, %s186
      %s204 = sphi 0, %s204
      %s206 = sphi 0, %s204
      %s207 = sphi 0, %s206
      %s221 = sphi 0, %s207
      %s227 = sphi 0, %s229
      %s230 = sphi 0, %s227
      %s231 = sphi 0, %s230
      %s247 = sphi 0, %s231
      %s253 = sphi 0, %s255
      %s256 = sphi 0, %s253
      %s257 = sphi 0, %s256
      %s273 = sphi 0, %s257
    $region4: #{tpu_custom_call.1} parent=1 // loop_header_branch
      %26 = sbr.rel (%p24) target = $region8
    $region5: #{tpu_custom_call.1} parent=1 // loop_body
      %s28 = ssub.s32 %s23, 1
      %s29 = ssub.s32 %s23, 2
      %s30 = sadd.s32 %s23, 1
      %s31 = ssub.s32 %s23, %s30
      %p32 = scmp.eq.s32.totalorder %s31, 0
      %s34 = sadd.s32 %s33, 1
      %s35 = scalar_select %p32, %s33, %s34
      %p38 = pneg %p32
      %p39 = scmp.eq.s32.totalorder %s23, 1
      %p40 = por %p38, %p39
      %p41 = scmp.ne.s32.totalorder %s33, %s36
      %p42 = scmp.eq.s32.totalorder %s23, 0
      %p43 = por %p41, %p42
      %p44 = scmp.ne.s32.totalorder %s33, %s36
      %p45 = scmp.eq.s32.totalorder %s28, 1
      %p46 = por %p44, %p45
      %p47 = scmp.ne.s32.totalorder %s36, %s37
      %p48 = scmp.eq.s32.totalorder %s28, 0
      %p49 = por %p47, %p48
      %p50 = scmp.ne.s32.totalorder %s36, %s37
      %p51 = scmp.eq.s32.totalorder %s29, 1
      %p52 = por %p50, %p51
      %p54 = scmp.ne.s32.totalorder %s37, %s53
      %p55 = scmp.eq.s32.totalorder %s29, 0
      %p56 = por %p54, %p55
      %s58 = sadd.s32 %s57, 1
      %p61 = scmp.eq.s32.totalorder %s23, 1
      %p62 = scmp.ne.s32.totalorder %s57, %s59
      %p63 = scmp.eq.s32.totalorder %s23, 0
      %p64 = por %p62, %p63
      %p65 = scmp.ne.s32.totalorder %s57, %s59
      %p66 = scmp.eq.s32.totalorder %s28, 1
      %p67 = por %p65, %p66
      %p68 = scmp.ne.s32.totalorder %s59, %s60
      %p69 = scmp.eq.s32.totalorder %s28, 0
      %p70 = por %p68, %p69
      %p71 = scmp.ne.s32.totalorder %s59, %s60
      %p72 = scmp.eq.s32.totalorder %s29, 1
      %p73 = por %p71, %p72
      %p75 = scmp.ne.s32.totalorder %s60, %s74
      %p76 = scmp.eq.s32.totalorder %s29, 0
      %p77 = por %p75, %p76
      %s79 = sadd.s32 %s78, 1
      %p82 = scmp.eq.s32.totalorder %s23, 1
      %p83 = scmp.ne.s32.totalorder %s78, %s80
      %p84 = scmp.eq.s32.totalorder %s23, 0
      %p85 = por %p83, %p84
      %p86 = scmp.ne.s32.totalorder %s78, %s80
      %p87 = scmp.eq.s32.totalorder %s28, 1
      %p88 = por %p86, %p87
      %p89 = scmp.ne.s32.totalorder %s80, %s81
      %p90 = scmp.eq.s32.totalorder %s28, 0
      %p91 = por %p89, %p90
      %p92 = scmp.ne.s32.totalorder %s80, %s81
      %p93 = scmp.eq.s32.totalorder %s29, 1
      %p94 = por %p92, %p93
      %p96 = scmp.ne.s32.totalorder %s81, %s95
      %p97 = scmp.eq.s32.totalorder %s29, 0
      %p98 = por %p96, %p97
      %s100 = sadd.s32 %s99, 1
      %p103 = scmp.eq.s32.totalorder %s23, 1
      %p104 = scmp.ne.s32.totalorder %s99, %s101
      %p105 = scmp.eq.s32.totalorder %s23, 0
      %p106 = por %p104, %p105
      %p107 = scmp.ne.s32.totalorder %s99, %s101
      %p108 = scmp.eq.s32.totalorder %s28, 1
      %p109 = por %p107, %p108
      %p110 = scmp.ne.s32.totalorder %s101, %s102
      %p111 = scmp.eq.s32.totalorder %s28, 0
      %p112 = por %p110, %p111
      %p113 = scmp.ne.s32.totalorder %s101, %s102
      %p114 = scmp.eq.s32.totalorder %s29, 1
      %p115 = por %p113, %p114
      %p117 = scmp.ne.s32.totalorder %s102, %s116
      %p118 = scmp.eq.s32.totalorder %s29, 0
      %p119 = por %p117, %p118
      %s121 = sadd.s32 %s120, 1
      %p124 = scmp.eq.s32.totalorder %s23, 1
      %p125 = scmp.ne.s32.totalorder %s120, %s122
      %p126 = scmp.eq.s32.totalorder %s23, 0
      %p127 = por %p125, %p126
      %p128 = scmp.ne.s32.totalorder %s120, %s122
      %p129 = scmp.eq.s32.totalorder %s28, 1
      %p130 = por %p128, %p129
      %p131 = scmp.ne.s32.totalorder %s122, %s123
      %p132 = scmp.eq.s32.totalorder %s28, 0
      %p133 = por %p131, %p132
      %p134 = scmp.ne.s32.totalorder %s122, %s123
      %p135 = scmp.eq.s32.totalorder %s29, 1
      %p136 = por %p134, %p135
      %p138 = scmp.ne.s32.totalorder %s123, %s137
      %p139 = scmp.eq.s32.totalorder %s29, 0
      %p140 = por %p138, %p139
      %s142 = sadd.s32 %s141, 1
      %p145 = scmp.eq.s32.totalorder %s23, 1
      %p146 = scmp.ne.s32.totalorder %s141, %s143
      %p147 = scmp.eq.s32.totalorder %s23, 0
      %p148 = por %p146, %p147
      %p149 = scmp.ne.s32.totalorder %s141, %s143
      %p150 = scmp.eq.s32.totalorder %s28, 1
      %p151 = por %p149, %p150
      %p152 = scmp.ne.s32.totalorder %s143, %s144
      %p153 = scmp.eq.s32.totalorder %s28, 0
      %p154 = por %p152, %p153
      %p155 = scmp.ne.s32.totalorder %s143, %s144
      %p156 = scmp.eq.s32.totalorder %s29, 1
      %p157 = por %p155, %p156
      %p159 = scmp.ne.s32.totalorder %s144, %s158
      %p160 = scmp.eq.s32.totalorder %s29, 0
      %p161 = por %p159, %p160
      %s163 = sadd.s32 %s162, 1
      %p166 = scmp.eq.s32.totalorder %s23, 1
      %p167 = scmp.ne.s32.totalorder %s162, %s164
      %p168 = scmp.eq.s32.totalorder %s23, 0
      %p169 = por %p167, %p168
      %p170 = scmp.ne.s32.totalorder %s162, %s164
      %p171 = scmp.eq.s32.totalorder %s28, 1
      %p172 = por %p170, %p171
      %p173 = scmp.ne.s32.totalorder %s164, %s165
      %p174 = scmp.eq.s32.totalorder %s28, 0
      %p175 = por %p173, %p174
      %p176 = scmp.ne.s32.totalorder %s164, %s165
      %p177 = scmp.eq.s32.totalorder %s29, 1
      %p178 = por %p176, %p177
      %p180 = scmp.ne.s32.totalorder %s165, %s179
      %p181 = scmp.eq.s32.totalorder %s29, 0
      %p182 = por %p180, %p181
      %s184 = sadd.s32 %s183, 1
      %p187 = scmp.eq.s32.totalorder %s23, 1
      %p188 = scmp.ne.s32.totalorder %s183, %s185
      %p189 = scmp.eq.s32.totalorder %s23, 0
      %p190 = por %p188, %p189
      %p191 = scmp.ne.s32.totalorder %s183, %s185
      %p192 = scmp.eq.s32.totalorder %s28, 1
      %p193 = por %p191, %p192
      %p194 = scmp.ne.s32.totalorder %s185, %s186
      %p195 = scmp.eq.s32.totalorder %s28, 0
      %p196 = por %p194, %p195
      %p197 = scmp.ne.s32.totalorder %s185, %s186
      %p198 = scmp.eq.s32.totalorder %s29, 1
      %p199 = por %p197, %p198
      %p201 = scmp.ne.s32.totalorder %s186, %s200
      %p202 = scmp.eq.s32.totalorder %s29, 0
      %p203 = por %p201, %p202
      %s205 = sadd.s32 %s204, 1
      %p208 = scmp.eq.s32.totalorder %s23, 1
      %p209 = scmp.ne.s32.totalorder %s204, %s206
      %p210 = scmp.eq.s32.totalorder %s23, 0
      %p211 = por %p209, %p210
      %p212 = scmp.ne.s32.totalorder %s204, %s206
      %p213 = scmp.eq.s32.totalorder %s28, 1
      %p214 = por %p212, %p213
      %p215 = scmp.ne.s32.totalorder %s206, %s207
      %p216 = scmp.eq.s32.totalorder %s28, 0
      %p217 = por %p215, %p216
      %p218 = scmp.ne.s32.totalorder %s206, %s207
      %p219 = scmp.eq.s32.totalorder %s29, 1
      %p220 = por %p218, %p219
      %p222 = scmp.ne.s32.totalorder %s207, %s221
      %p223 = scmp.eq.s32.totalorder %s29, 0
      %p224 = por %p222, %p223
      %s225 = ssub.s32 %s23, %s30
      %p226 = scmp.eq.s32.totalorder %s225, 0
      %s228 = sadd.s32 %s227, 1
      %s229 = scalar_select %p226, %s227, %s228
      %p232 = pneg %p226
      %p233 = scmp.eq.s32.totalorder %s23, 1
      %p234 = por %p232, %p233
      %p235 = scmp.ne.s32.totalorder %s227, %s230
      %p236 = scmp.eq.s32.totalorder %s23, 0
      %p237 = por %p235, %p236
      %p238 = scmp.ne.s32.totalorder %s227, %s230
      %p239 = scmp.eq.s32.totalorder %s28, 1
      %p240 = por %p238, %p239
      %p241 = scmp.ne.s32.totalorder %s230, %s231
      %p242 = scmp.eq.s32.totalorder %s28, 0
      %p243 = por %p241, %p242
      %p244 = scmp.ne.s32.totalorder %s230, %s231
      %p245 = scmp.eq.s32.totalorder %s29, 1
      %p246 = por %p244, %p245
      %p248 = scmp.ne.s32.totalorder %s231, %s247
      %p249 = scmp.eq.s32.totalorder %s29, 0
      %p250 = por %p248, %p249
      %s251 = ssub.s32 %s23, %s30
      %p252 = scmp.eq.s32.totalorder %s251, 0
      %s254 = sadd.s32 %s253, 1
      %s255 = scalar_select %p252, %s253, %s254
      %p258 = pneg %p252
      %p259 = scmp.eq.s32.totalorder %s23, 1
      %p260 = por %p258, %p259
      %p261 = scmp.ne.s32.totalorder %s253, %s256
      %p262 = scmp.eq.s32.totalorder %s23, 0
      %p263 = por %p261, %p262
      %p264 = scmp.ne.s32.totalorder %s253, %s256
      %p265 = scmp.eq.s32.totalorder %s28, 1
      %p266 = por %p264, %p265
      %p267 = scmp.ne.s32.totalorder %s256, %s257
      %p268 = scmp.eq.s32.totalorder %s28, 0
      %p269 = por %p267, %p268
      %p270 = scmp.ne.s32.totalorder %s256, %s257
      %p271 = scmp.eq.s32.totalorder %s29, 1
      %p272 = por %p270, %p271
      %p274 = scmp.ne.s32.totalorder %s257, %s273
      %p275 = scmp.eq.s32.totalorder %s29, 0
      %p276 = por %p274, %p275
      %p277 = scmp.le.s32.totalorder 1, %s23
      %p278 = scmp.lt.s32.totalorder %s23, 3
      %p279 = pnand %p277, %p278
      %p280 = pneg %p279
      // Predicated region
      $region9: #{tpu_custom_call.1} parent=5 // pred_check
        _
      $region10: #{tpu_custom_call.1} parent=5 // pred_check_branch
        %282 = sbr.rel (%p279) target = $region12
      $region11: #{tpu_custom_call.1} parent=5 // pred_region
        %s283 = ssub.s32 %s23, 1
        // Predicated region
        $region13: #{tpu_custom_call.1} parent=11 // pred_check
          %p284 = pneg %p70
        $region14: #{tpu_custom_call.1} parent=11 // pred_check_branch
          %286 = sbr.rel (%p284) target = $region16
        $region15: #{tpu_custom_call.1} parent=11 // pred_region
          _
        $region16: #{tpu_custom_call.1} parent=11 // pred_fallthru
          _
        // Predicated region
        $region17: #{tpu_custom_call.1} parent=11 // pred_check
          %p287 = pneg %p91
        $region18: #{tpu_custom_call.1} parent=11 // pred_check_branch
          %289 = sbr.rel (%p287) target = $region20
        $region19: #{tpu_custom_call.1} parent=11 // pred_region
          _
        $region20: #{tpu_custom_call.1} parent=11 // pred_fallthru
          _
        // Predicated region
        $region21: #{tpu_custom_call.1} parent=11 // pred_check
          %p290 = pneg %p112
        $region22: #{tpu_custom_call.1} parent=11 // pred_check_branch
          %292 = sbr.rel (%p290) target = $region24
        $region23: #{tpu_custom_call.1} parent=11 // pred_region
          _
        $region24: #{tpu_custom_call.1} parent=11 // pred_fallthru
          _
        // Predicated region
        $region25: #{tpu_custom_call.1} parent=11 // pred_check
          %p293 = pneg %p133
        $region26: #{tpu_custom_call.1} parent=11 // pred_check_branch
          %295 = sbr.rel (%p293) target = $region28
        $region27: #{tpu_custom_call.1} parent=11 // pred_region
          _
        $region28: #{tpu_custom_call.1} parent=11 // pred_fallthru
          _
        // Predicated region
        $region29: #{tpu_custom_call.1} parent=11 // pred_check
          %p296 = pneg %p154
        $region30: #{tpu_custom_call.1} parent=11 // pred_check_branch
          %298 = sbr.rel (%p296) target = $region32
        $region31: #{tpu_custom_call.1} parent=11 // pred_region
          _
        $region32: #{tpu_custom_call.1} parent=11 // pred_fallthru
          _
        // Predicated region
        $region33: #{tpu_custom_call.1} parent=11 // pred_check
          %p299 = pneg %p175
        $region34: #{tpu_custom_call.1} parent=11 // pred_check_branch
          %301 = sbr.rel (%p299) target = $region36
        $region35: #{tpu_custom_call.1} parent=11 // pred_region
          _
        $region36: #{tpu_custom_call.1} parent=11 // pred_fallthru
          _
        // Predicated region
        $region37: #{tpu_custom_call.1} parent=11 // pred_check
          %p302 = pneg %p196
        $region38: #{tpu_custom_call.1} parent=11 // pred_check_branch
          %304 = sbr.rel (%p302) target = $region40
        $region39: #{tpu_custom_call.1} parent=11 // pred_region
          _
        $region40: #{tpu_custom_call.1} parent=11 // pred_fallthru
          _
        // Predicated region
        $region41: #{tpu_custom_call.1} parent=11 // pred_check
          %p305 = pneg %p217
        $region42: #{tpu_custom_call.1} parent=11 // pred_check_branch
          %307 = sbr.rel (%p305) target = $region44
        $region43: #{tpu_custom_call.1} parent=11 // pred_region
          _
        $region44: #{tpu_custom_call.1} parent=11 // pred_fallthru
          _
      $region12: #{tpu_custom_call.1} parent=5 // pred_fallthru
        _
      %p308 = scmp.lt.s32.totalorder %s23, 2
      // Predicated region
      $region45: #{tpu_custom_call.1} parent=5 // pred_check
        %p309 = pneg %p308
      $region46: #{tpu_custom_call.1} parent=5 // pred_check_branch
        %311 = sbr.rel (%p309) target = $region48
      $region47: #{tpu_custom_call.1} parent=5 // pred_region
        // Predicated region
        $region49: #{tpu_custom_call.1} parent=47 // pred_check
          %p312 = pneg %p43
        $region50: #{tpu_custom_call.1} parent=47 // pred_check_branch
          %314 = sbr.rel (%p312) target = $region52
        $region51: #{tpu_custom_call.1} parent=47 // pred_region
          %p315 = scmp.lt.s32.totalorder %s23, 1
          %s316 = scalar_select %p315, %s23, 1
          %s317 = smul.addr %s316, 20
          %s318 = smul.addr %s317, 8
          %s319 = scalar_lea.vmem %s0, %s318
        $region52: #{tpu_custom_call.1} parent=47 // pred_fallthru
          _
      $region48: #{tpu_custom_call.1} parent=5 // pred_fallthru
        _
      %p320 = scmp.le.s32.totalorder 1, %s23
      %p321 = scmp.lt.s32.totalorder %s23, 3
      %p322 = pnand %p320, %p321
      %p323 = pneg %p322
      // Predicated region
      $region53: #{tpu_custom_call.1} parent=5 // pred_check
        _
      $region54: #{tpu_custom_call.1} parent=5 // pred_check_branch
        %325 = sbr.rel (%p322) target = $region56
      $region55: #{tpu_custom_call.1} parent=5 // pred_region
        %s326 = ssub.s32 %s23, 1
        %p327 = scmp.lt.s32.totalorder %s28, 1
        %s328 = scalar_select %p327, %s28, 1
        %s329 = smul.addr %s328, 20
        %s330 = smul.addr %s329, 8
        %s331 = scalar_lea.vmem %s0, %s330
        %p332 = pneg %p49
        %p333 = pneg %p46
        %p334 = pneg %p70
        %p335 = pneg %p67
        %p336 = pneg %p91
        %p337 = pneg %p88
        %p338 = pneg %p112
        %p339 = pneg %p109
        %p340 = pneg %p133
        %p341 = pneg %p130
        %p342 = pneg %p154
        %p343 = pneg %p151
        %p344 = pneg %p175
        %p345 = pneg %p172
        %p346 = pneg %p196
        %p347 = pneg %p193
        %p348 = pneg %p217
        %p349 = pneg %p214
        %p350 = pneg %p243
        %p351 = pneg %p240
        %s352 = sand.u32 %s230, 1
        %s353 = scalar_lea.sflag [#allocation3], %s352
        %s354 = sand.u32 %s230, 1
        %s355 = smul.addr %s354, 64
        %s356 = scalar_lea.vmem [#allocation2], %s355
        %p357 = pneg %p269
        %p358 = pneg %p266
        %s359 = sand.u32 %s256, 1
        %s360 = scalar_lea.sflag [#allocation5], %s359
        %s361 = sand.u32 %s256, 1
        %s362 = smul.addr %s361, 64
        %s363 = scalar_lea.vmem [#allocation4], %s362
        %p364 = scmp.lt.s32.totalorder %s28, 1
        %s365 = scalar_select %p364, %s28, 1
        %s366 = smul.addr %s365, 20
        %s367 = smul.addr %s366, 8
        %s368 = scalar_lea.vmem %s0, %s367
        %v369 = vld [vmem:[%s368] sm:$0xff]
        %v370 = vld [vmem:[%s368 + $0x8] sm:$0x3]
        %v371 = vld [vmem:[%s368 + $0x10] sm:$0xff]
        %v372 = vld [vmem:[%s368 + $0x18] sm:$0x3]
        %v373 = vld [vmem:[%s368 + $0x20] sm:$0xff]
        %v374 = vld [vmem:[%s368 + $0x28] sm:$0x3]
        %v375 = vld [vmem:[%s368 + $0x30] sm:$0xff]
        %v376 = vld [vmem:[%s368 + $0x38] sm:$0x3]
        %v377 = vld [vmem:[%s368 + $0x40] sm:$0xff]
        %v378 = vld [vmem:[%s368 + $0x48] sm:$0x3]
        %v379 = vld [vmem:[%s368 + $0x50] sm:$0xff]
        %v380 = vld [vmem:[%s368 + $0x58] sm:$0x3]
        %v381 = vld [vmem:[%s368 + $0x60] sm:$0xff]
        %v382 = vld [vmem:[%s368 + $0x68] sm:$0x3]
        %v383 = vld [vmem:[%s368 + $0x70] sm:$0xff]
        %v384 = vld [vmem:[%s368 + $0x78] sm:$0x3]
        %v385 = vld [vmem:[%s368 + $0x80] sm:$0xff]
        %v386 = vld [vmem:[%s368 + $0x88] sm:$0x3]
        %v387 = vld [vmem:[%s368 + $0x90] sm:$0xff]
        %v388 = vld [vmem:[%s368 + $0x98] sm:$0x3]
        %v389 = vld [vmem:[%s1] sm:$0xff]
        %v390 = vld [vmem:[%s1 + $0x8] sm:$0x1]
        %v391 = vld [vmem:[%s2] sm:$0x1]
        %v392 = vperm.slane %v389, 0
        %v393 = vmul.f32 %v369, %v392
        %v394 = vmul.f32 %v371, %v392
        %v395 = vmul.f32 %v373, %v392
        %v396 = vmul.f32 %v375, %v392
        %v397 = vmul.f32 %v377, %v392
        %v398 = vmul.f32 %v379, %v392
        %v399 = vmul.f32 %v381, %v392
        %v400 = vmul.f32 %v383, %v392
        %v402 = vperm.slane %v391, 0
        %v404 = vadd.f32 %v393, %v402
        %v405 = vadd.f32 %v394, %v402
        %v406 = vadd.f32 %v395, %v402
        %v407 = vadd.f32 %v396, %v402
        %v408 = vadd.f32 %v397, %v402
        %v409 = vadd.f32 %v398, %v402
        %v410 = vadd.f32 %v399, %v402
        %v411 = vadd.f32 %v400, %v402
        %v412 = vperm.slane %v389, 1
        %v413 = vmul.f32 %v369, %v412
        %v414 = vmul.f32 %v370, %v412
        %v415 = vmul.f32 %v371, %v412
        %v416 = vmul.f32 %v372, %v412
        %v417 = vmul.f32 %v373, %v412
        %v418 = vmul.f32 %v374, %v412
        %v419 = vmul.f32 %v375, %v412
        %v420 = vmul.f32 %v376, %v412
        %v421 = vmul.f32 %v377, %v412
        %v422 = vmul.f32 %v378, %v412
        %v423 = vmul.f32 %v379, %v412
        %v424 = vmul.f32 %v380, %v412
        %v425 = vmul.f32 %v381, %v412
        %v426 = vmul.f32 %v382, %v412
        %v427 = vmul.f32 %v383, %v412
        %v428 = vmul.f32 %v384, %v412
        %vm445 = vcmask 1046528
        %v446 = vrot.slane %v413, 1
        %v447 = vrot.slane %v414, 1
        %v448 = vsel %vm445, %v446, %v447
        %v449 = vrot.slane %v415, 1
        %v450 = vrot.slane %v416, 1
        %v451 = vsel %vm445, %v449, %v450
        %v452 = vrot.slane %v417, 1
        %v453 = vrot.slane %v418, 1
        %v454 = vsel %vm445, %v452, %v453
        %v455 = vrot.slane %v419, 1
        %v456 = vrot.slane %v420, 1
        %v457 = vsel %vm445, %v455, %v456
        %v458 = vrot.slane %v421, 1
        %v459 = vrot.slane %v422, 1
        %v460 = vsel %vm445, %v458, %v459
        %v461 = vrot.slane %v423, 1
        %v462 = vrot.slane %v424, 1
        %v463 = vsel %vm445, %v461, %v462
        %v464 = vrot.slane %v425, 1
        %v465 = vrot.slane %v426, 1
        %v466 = vsel %vm445, %v464, %v465
        %v467 = vrot.slane %v427, 1
        %v468 = vrot.slane %v428, 1
        %v469 = vsel %vm445, %v467, %v468
        %v478 = vadd.f32 %v404, %v448
        %v479 = vadd.f32 %v405, %v451
        %v480 = vadd.f32 %v406, %v454
        %v481 = vadd.f32 %v407, %v457
        %v482 = vadd.f32 %v408, %v460
        %v483 = vadd.f32 %v409, %v463
        %v484 = vadd.f32 %v410, %v466
        %v485 = vadd.f32 %v411, %v469
        %v486 = vperm.slane %v389, 2
        %v487 = vmul.f32 %v369, %v486
        %v488 = vmul.f32 %v370, %v486
        %v489 = vmul.f32 %v371, %v486
        %v490 = vmul.f32 %v372, %v486
        %v491 = vmul.f32 %v373, %v486
        %v492 = vmul.f32 %v374, %v486
        %v493 = vmul.f32 %v375, %v486
        %v494 = vmul.f32 %v376, %v486
        %v495 = vmul.f32 %v377, %v486
        %v496 = vmul.f32 %v378, %v486
        %v497 = vmul.f32 %v379, %v486
        %v498 = vmul.f32 %v380, %v486
        %v499 = vmul.f32 %v381, %v486
        %v500 = vmul.f32 %v382, %v486
        %v501 = vmul.f32 %v383, %v486
        %v502 = vmul.f32 %v384, %v486
        %vm519 = vcmask 1045504
        %v520 = vrot.slane %v487, 2
        %v521 = vrot.slane %v488, 2
        %v522 = vsel %vm519, %v520, %v521
        %v523 = vrot.slane %v489, 2
        %v524 = vrot.slane %v490, 2
        %v525 = vsel %vm519, %v523, %v524
        %v526 = vrot.slane %v491, 2
        %v527 = vrot.slane %v492, 2
        %v528 = vsel %vm519, %v526, %v527
        %v529 = vrot.slane %v493, 2
        %v530 = vrot.slane %v494, 2
        %v531 = vsel %vm519, %v529, %v530
        %v532 = vrot.slane %v495, 2
        %v533 = vrot.slane %v496, 2
        %v534 = vsel %vm519, %v532, %v533
        %v535 = vrot.slane %v497, 2
        %v536 = vrot.slane %v498, 2
        %v537 = vsel %vm519, %v535, %v536
        %v538 = vrot.slane %v499, 2
        %v539 = vrot.slane %v500, 2
        %v540 = vsel %vm519, %v538, %v539
        %v541 = vrot.slane %v501, 2
        %v542 = vrot.slane %v502, 2
        %v543 = vsel %vm519, %v541, %v542
        %v552 = vadd.f32 %v478, %v522
        %v553 = vadd.f32 %v479, %v525
        %v554 = vadd.f32 %v480, %v528
        %v555 = vadd.f32 %v481, %v531
        %v556 = vadd.f32 %v482, %v534
        %v557 = vadd.f32 %v483, %v537
        %v558 = vadd.f32 %v484, %v540
        %v559 = vadd.f32 %v485, %v543
        %v560 = vperm.slane %v389, 3
        %v561 = vmul.f32 %v371, %v560
        %v562 = vmul.f32 %v373, %v560
        %v563 = vmul.f32 %v375, %v560
        %v564 = vmul.f32 %v377, %v560
        %v565 = vmul.f32 %v379, %v560
        %v566 = vmul.f32 %v381, %v560
        %v567 = vmul.f32 %v383, %v560
        %v568 = vmul.f32 %v385, %v560
        %v569 = vadd.f32 %v552, %v561
        %v570 = vadd.f32 %v553, %v562
        %v571 = vadd.f32 %v554, %v563
        %v572 = vadd.f32 %v555, %v564
        %v573 = vadd.f32 %v556, %v565
        %v574 = vadd.f32 %v557, %v566
        %v575 = vadd.f32 %v558, %v567
        %v576 = vadd.f32 %v559, %v568
        %v577 = vperm.slane %v389, 4
        %v578 = vmul.f32 %v371, %v577
        %v579 = vmul.f32 %v372, %v577
        %v580 = vmul.f32 %v373, %v577
        %v581 = vmul.f32 %v374, %v577
        %v582 = vmul.f32 %v375, %v577
        %v583 = vmul.f32 %v376, %v577
        %v584 = vmul.f32 %v377, %v577
        %v585 = vmul.f32 %v378, %v577
        %v586 = vmul.f32 %v379, %v577
        %v587 = vmul.f32 %v380, %v577
        %v588 = vmul.f32 %v381, %v577
        %v589 = vmul.f32 %v382, %v577
        %v590 = vmul.f32 %v383, %v577
        %v591 = vmul.f32 %v384, %v577
        %v592 = vmul.f32 %v385, %v577
        %v593 = vmul.f32 %v386, %v577
        %v610 = vrot.slane %v578, 1
        %v611 = vrot.slane %v579, 1
        %v612 = vsel %vm445, %v610, %v611
        %v613 = vrot.slane %v580, 1
        %v614 = vrot.slane %v581, 1
        %v615 = vsel %vm445, %v613, %v614
        %v616 = vrot.slane %v582, 1
        %v617 = vrot.slane %v583, 1
        %v618 = vsel %vm445, %v616, %v617
        %v619 = vrot.slane %v584, 1
        %v620 = vrot.slane %v585, 1
        %v621 = vsel %vm445, %v619, %v620
        %v622 = vrot.slane %v586, 1
        %v623 = vrot.slane %v587, 1
        %v624 = vsel %vm445, %v622, %v623
        %v625 = vrot.slane %v588, 1
        %v626 = vrot.slane %v589, 1
        %v627 = vsel %vm445, %v625, %v626
        %v628 = vrot.slane %v590, 1
        %v629 = vrot.slane %v591, 1
        %v630 = vsel %vm445, %v628, %v629
        %v631 = vrot.slane %v592, 1
        %v632 = vrot.slane %v593, 1
        %v633 = vsel %vm445, %v631, %v632
        %v642 = vadd.f32 %v569, %v612
        %v643 = vadd.f32 %v570, %v615
        %v644 = vadd.f32 %v571, %v618
        %v645 = vadd.f32 %v572, %v621
        %v646 = vadd.f32 %v573, %v624
        %v647 = vadd.f32 %v574, %v627
        %v648 = vadd.f32 %v575, %v630
        %v649 = vadd.f32 %v576, %v633
        %v650 = vperm.slane %v389, 5
        %v651 = vmul.f32 %v371, %v650
        %v652 = vmul.f32 %v372, %v650
        %v653 = vmul.f32 %v373, %v650
        %v654 = vmul.f32 %v374, %v650
        %v655 = vmul.f32 %v375, %v650
        %v656 = vmul.f32 %v376, %v650
        %v657 = vmul.f32 %v377, %v650
        %v658 = vmul.f32 %v378, %v650
        %v659 = vmul.f32 %v379, %v650
        %v660 = vmul.f32 %v380, %v650
        %v661 = vmul.f32 %v381, %v650
        %v662 = vmul.f32 %v382, %v650
        %v663 = vmul.f32 %v383, %v650
        %v664 = vmul.f32 %v384, %v650
        %v665 = vmul.f32 %v385, %v650
        %v666 = vmul.f32 %v386, %v650
        %v683 = vrot.slane %v651, 2
        %v684 = vrot.slane %v652, 2
        %v685 = vsel %vm519, %v683, %v684
        %v686 = vrot.slane %v653, 2
        %v687 = vrot.slane %v654, 2
        %v688 = vsel %vm519, %v686, %v687
        %v689 = vrot.slane %v655, 2
        %v690 = vrot.slane %v656, 2
        %v691 = vsel %vm519, %v689, %v690
        %v692 = vrot.slane %v657, 2
        %v693 = vrot.slane %v658, 2
        %v694 = vsel %vm519, %v692, %v693
        %v695 = vrot.slane %v659, 2
        %v696 = vrot.slane %v660, 2
        %v697 = vsel %vm519, %v695, %v696
        %v698 = vrot.slane %v661, 2
        %v699 = vrot.slane %v662, 2
        %v700 = vsel %vm519, %v698, %v699
        %v701 = vrot.slane %v663, 2
        %v702 = vrot.slane %v664, 2
        %v703 = vsel %vm519, %v701, %v702
        %v704 = vrot.slane %v665, 2
        %v705 = vrot.slane %v666, 2
        %v706 = vsel %vm519, %v704, %v705
        %v715 = vadd.f32 %v642, %v685
        %v716 = vadd.f32 %v643, %v688
        %v717 = vadd.f32 %v644, %v691
        %v718 = vadd.f32 %v645, %v694
        %v719 = vadd.f32 %v646, %v697
        %v720 = vadd.f32 %v647, %v700
        %v721 = vadd.f32 %v648, %v703
        %v722 = vadd.f32 %v649, %v706
        %v723 = vperm.slane %v389, 6
        %v724 = vmul.f32 %v373, %v723
        %v725 = vmul.f32 %v375, %v723
        %v726 = vmul.f32 %v377, %v723
        %v727 = vmul.f32 %v379, %v723
        %v728 = vmul.f32 %v381, %v723
        %v729 = vmul.f32 %v383, %v723
        %v730 = vmul.f32 %v385, %v723
        %v731 = vmul.f32 %v387, %v723
        %v732 = vadd.f32 %v715, %v724
        %v733 = vadd.f32 %v716, %v725
        %v734 = vadd.f32 %v717, %v726
        %v735 = vadd.f32 %v718, %v727
        %v736 = vadd.f32 %v719, %v728
        %v737 = vadd.f32 %v720, %v729
        %v738 = vadd.f32 %v721, %v730
        %v739 = vadd.f32 %v722, %v731
        %v740 = vperm.slane %v389, 7
        %v741 = vmul.f32 %v373, %v740
        %v742 = vmul.f32 %v374, %v740
        %v743 = vmul.f32 %v375, %v740
        %v744 = vmul.f32 %v376, %v740
        %v745 = vmul.f32 %v377, %v740
        %v746 = vmul.f32 %v378, %v740
        %v747 = vmul.f32 %v379, %v740
        %v748 = vmul.f32 %v380, %v740
        %v749 = vmul.f32 %v381, %v740
        %v750 = vmul.f32 %v382, %v740
        %v751 = vmul.f32 %v383, %v740
        %v752 = vmul.f32 %v384, %v740
        %v753 = vmul.f32 %v385, %v740
        %v754 = vmul.f32 %v386, %v740
        %v755 = vmul.f32 %v387, %v740
        %v756 = vmul.f32 %v388, %v740
        %v773 = vrot.slane %v741, 1
        %v774 = vrot.slane %v742, 1
        %v775 = vsel %vm445, %v773, %v774
        %v776 = vrot.slane %v743, 1
        %v777 = vrot.slane %v744, 1
        %v778 = vsel %vm445, %v776, %v777
        %v779 = vrot.slane %v745, 1
        %v780 = vrot.slane %v746, 1
        %v781 = vsel %vm445, %v779, %v780
        %v782 = vrot.slane %v747, 1
        %v783 = vrot.slane %v748, 1
        %v784 = vsel %vm445, %v782, %v783
        %v785 = vrot.slane %v749, 1
        %v786 = vrot.slane %v750, 1
        %v787 = vsel %vm445, %v785, %v786
        %v788 = vrot.slane %v751, 1
        %v789 = vrot.slane %v752, 1
        %v790 = vsel %vm445, %v788, %v789
        %v791 = vrot.slane %v753, 1
        %v792 = vrot.slane %v754, 1
        %v793 = vsel %vm445, %v791, %v792
        %v794 = vrot.slane %v755, 1
        %v795 = vrot.slane %v756, 1
        %v796 = vsel %vm445, %v794, %v795
        %v805 = vadd.f32 %v732, %v775
        %v806 = vadd.f32 %v733, %v778
        %v807 = vadd.f32 %v734, %v781
        %v808 = vadd.f32 %v735, %v784
        %v809 = vadd.f32 %v736, %v787
        %v810 = vadd.f32 %v737, %v790
        %v811 = vadd.f32 %v738, %v793
        %v812 = vadd.f32 %v739, %v796
        %v813 = vperm.slane %v390, 0
        %v814 = vmul.f32 %v373, %v813
        %v815 = vmul.f32 %v374, %v813
        %v816 = vmul.f32 %v375, %v813
        %v817 = vmul.f32 %v376, %v813
        %v818 = vmul.f32 %v377, %v813
        %v819 = vmul.f32 %v378, %v813
        %v820 = vmul.f32 %v379, %v813
        %v821 = vmul.f32 %v380, %v813
        %v822 = vmul.f32 %v381, %v813
        %v823 = vmul.f32 %v382, %v813
        %v824 = vmul.f32 %v383, %v813
        %v825 = vmul.f32 %v384, %v813
        %v826 = vmul.f32 %v385, %v813
        %v827 = vmul.f32 %v386, %v813
        %v828 = vmul.f32 %v387, %v813
        %v829 = vmul.f32 %v388, %v813
        %v846 = vrot.slane %v814, 2
        %v847 = vrot.slane %v815, 2
        %v848 = vsel %vm519, %v846, %v847
        %v849 = vrot.slane %v816, 2
        %v850 = vrot.slane %v817, 2
        %v851 = vsel %vm519, %v849, %v850
        %v852 = vrot.slane %v818, 2
        %v853 = vrot.slane %v819, 2
        %v854 = vsel %vm519, %v852, %v853
        %v855 = vrot.slane %v820, 2
        %v856 = vrot.slane %v821, 2
        %v857 = vsel %vm519, %v855, %v856
        %v858 = vrot.slane %v822, 2
        %v859 = vrot.slane %v823, 2
        %v860 = vsel %vm519, %v858, %v859
        %v861 = vrot.slane %v824, 2
        %v862 = vrot.slane %v825, 2
        %v863 = vsel %vm519, %v861, %v862
        %v864 = vrot.slane %v826, 2
        %v865 = vrot.slane %v827, 2
        %v866 = vsel %vm519, %v864, %v865
        %v867 = vrot.slane %v828, 2
        %v868 = vrot.slane %v829, 2
        %v869 = vsel %vm519, %v867, %v868
        %v878 = vadd.f32 %v805, %v848
        %v879 = vadd.f32 %v806, %v851
        %v880 = vadd.f32 %v807, %v854
        %v881 = vadd.f32 %v808, %v857
        %v882 = vadd.f32 %v809, %v860
        %v883 = vadd.f32 %v810, %v863
        %v884 = vadd.f32 %v811, %v866
        %v885 = vadd.f32 %v812, %v869
        %v886 = vmax.f32 %v878, 0.0
        %v887 = vmax.f32 %v879, 0.0
        %v888 = vmax.f32 %v880, 0.0
        %v889 = vmax.f32 %v881, 0.0
        %v890 = vmax.f32 %v882, 0.0
        %v891 = vmax.f32 %v883, 0.0
        %v892 = vmax.f32 %v884, 0.0
        %v893 = vmax.f32 %v885, 0.0
        %v894 = vmin.f32 %v886, 6.0
        %v895 = vmin.f32 %v887, 6.0
        %v896 = vmin.f32 %v888, 6.0
        %v897 = vmin.f32 %v889, 6.0
        %v898 = vmin.f32 %v890, 6.0
        %v899 = vmin.f32 %v891, 6.0
        %v900 = vmin.f32 %v892, 6.0
        %v901 = vmin.f32 %v893, 6.0
        %v902 = vpack.c.bf16 %v895, %v894
        %v903 = vpack.c.bf16 %v897, %v896
        %v904 = vpack.c.bf16 %v899, %v898
        %v905 = vpack.c.bf16 %v901, %v900
        %v906 = vld [vmem:[%s3] sm:$0xf]
        %v907 = vld [vmem:[%s3 + $0x4] sm:$0xf]
        %v908 = vld [vmem:[%s3 + $0x8] sm:$0xf]
        %v909 = vld [vmem:[%s3 + $0xc] sm:$0xf]
        %v910 = vld [vmem:[%s3 + $0x10] sm:$0xf]
        %v911 = vld [vmem:[%s3 + $0x14] sm:$0xf]
        %v912 = vld [vmem:[%s3 + $0x18] sm:$0xf]
        %v913 = vld [vmem:[%s3 + $0x1c] sm:$0xf]
        %v914 = vld [vmem:[%s3 + $0x20] sm:$0xf]
        %v915 = vld [vmem:[%s3 + $0x24] sm:$0xf]
        %v916 = vld [vmem:[%s3 + $0x28] sm:$0xf]
        %v917 = vld [vmem:[%s3 + $0x2c] sm:$0xf]
        %v918 = vld [vmem:[%s3 + $0x30] sm:$0xf]
        %v919 = vld [vmem:[%s3 + $0x34] sm:$0xf]
        %v920 = vld [vmem:[%s3 + $0x38] sm:$0xf]
        %v921 = vld [vmem:[%s3 + $0x3c] sm:$0xf]
        %v922 = vld [vmem:[%s4] sm:$0x1]
        %v924 = vperm.slane %v922, 0
        %v942 = vunpack.c.l.b16 %v906
        %v943 = vunpack.c.l.b16 %v907
        %v944 = vunpack.c.l.b16 %v908
        %v945 = vunpack.c.l.b16 %v909
        %v946 = vunpack.c.l.b16 %v910
        %v947 = vunpack.c.l.b16 %v911
        %v948 = vunpack.c.l.b16 %v912
        %v949 = vunpack.c.l.b16 %v913
        %v950 = vunpack.c.l.b16 %v914
        %v951 = vunpack.c.l.b16 %v915
        %v952 = vunpack.c.l.b16 %v916
        %v953 = vunpack.c.l.b16 %v917
        %v954 = vunpack.c.l.b16 %v918
        %v955 = vunpack.c.l.b16 %v919
        %v956 = vunpack.c.l.b16 %v920
        %v957 = vunpack.c.l.b16 %v921
        %v958 = vpack.c.b16 %v943, %v942
        %v959 = vpack.c.b16 %v945, %v944
        %v960 = vpack.c.b16 %v947, %v946
        %v961 = vpack.c.b16 %v949, %v948
        %v962 = vpack.c.b16 %v951, %v950
        %v963 = vpack.c.b16 %v953, %v952
        %v964 = vpack.c.b16 %v955, %v954
        %v965 = vpack.c.b16 %v957, %v956
        %974 = vmatpush.bf16.msra.mxu0 %v965
        %975 = vmatpush.bf16.msra.mxu0 %v964
        %976 = vmatpush.bf16.msra.mxu0 %v963
        %977 = vmatpush.bf16.msra.mxu0 %v962
        %978 = vmatpush.bf16.msra.mxu0 %v961
        %979 = vmatpush.bf16.msra.mxu0 %v960
        %980 = vmatpush.bf16.msra.mxu0 %v959
        %981 = vmatpush.bf16.msra.mxu0 %v958
        %982 = vmatmul.bf16.gmra.mxu0 %v902
        %v983 = vpop.f32.mrf.mxu0
        %v984 = vadd.f32 %v924, %v983
        %v985 = vpop.f32.mrf.mxu0
        %v986 = vadd.f32 %v924, %v985
        %987 = vmatmul.bf16.gmra.mxu0 %v903
        %v988 = vpop.f32.mrf.mxu0
        %v989 = vadd.f32 %v924, %v988
        %v990 = vpop.f32.mrf.mxu0
        %v991 = vadd.f32 %v924, %v990
        %992 = vmatmul.bf16.gmra.mxu0 %v904
        %v993 = vpop.f32.mrf.mxu0
        %v994 = vadd.f32 %v924, %v993
        %v995 = vpop.f32.mrf.mxu0
        %v996 = vadd.f32 %v924, %v995
        %997 = vmatmul.bf16.gmra.mxu0 %v905
        %v998 = vpop.f32.mrf.mxu0
        %v999 = vadd.f32 %v924, %v998
        %v1000 = vpop.f32.mrf.mxu0
        %v1001 = vadd.f32 %v924, %v1000
        %1002 = vdwg.mxu0
        %1003 = vst [vmem:[%s356] sm:$0xff] %v984
        %1004 = vst [vmem:[%s356 + $0x8] sm:$0xff] %v986
        %1005 = vst [vmem:[%s356 + $0x10] sm:$0xff] %v989
        %1006 = vst [vmem:[%s356 + $0x18] sm:$0xff] %v991
        %1007 = vst [vmem:[%s356 + $0x20] sm:$0xff] %v994
        %1008 = vst [vmem:[%s356 + $0x28] sm:$0xff] %v996
        %1009 = vst [vmem:[%s356 + $0x30] sm:$0xff] %v999
        %1010 = vst [vmem:[%s356 + $0x38] sm:$0xff] %v1001
        %v1011 = vld [vmem:[%s5] sm:$0xff]
        %v1012 = vld [vmem:[%s5 + $0x8] sm:$0x1]
        %v1013 = vld [vmem:[%s6] sm:$0x1]
        %v1014 = vperm.slane %v1011, 0
        %v1015 = vmul.f32 %v369, %v1014
        %v1016 = vmul.f32 %v371, %v1014
        %v1017 = vmul.f32 %v373, %v1014
        %v1018 = vmul.f32 %v375, %v1014
        %v1019 = vmul.f32 %v377, %v1014
        %v1020 = vmul.f32 %v379, %v1014
        %v1021 = vmul.f32 %v381, %v1014
        %v1022 = vmul.f32 %v383, %v1014
        %v1024 = vperm.slane %v1013, 0
        %v1026 = vadd.f32 %v1015, %v1024
        %v1027 = vadd.f32 %v1016, %v1024
        %v1028 = vadd.f32 %v1017, %v1024
        %v1029 = vadd.f32 %v1018, %v1024
        %v1030 = vadd.f32 %v1019, %v1024
        %v1031 = vadd.f32 %v1020, %v1024
        %v1032 = vadd.f32 %v1021, %v1024
        %v1033 = vadd.f32 %v1022, %v1024
        %v1034 = vperm.slane %v1011, 1
        %v1035 = vmul.f32 %v369, %v1034
        %v1036 = vmul.f32 %v370, %v1034
        %v1037 = vmul.f32 %v371, %v1034
        %v1038 = vmul.f32 %v372, %v1034
        %v1039 = vmul.f32 %v373, %v1034
        %v1040 = vmul.f32 %v374, %v1034
        %v1041 = vmul.f32 %v375, %v1034
        %v1042 = vmul.f32 %v376, %v1034
        %v1043 = vmul.f32 %v377, %v1034
        %v1044 = vmul.f32 %v378, %v1034
        %v1045 = vmul.f32 %v379, %v1034
        %v1046 = vmul.f32 %v380, %v1034
        %v1047 = vmul.f32 %v381, %v1034
        %v1048 = vmul.f32 %v382, %v1034
        %v1049 = vmul.f32 %v383, %v1034
        %v1050 = vmul.f32 %v384, %v1034
        %v1067 = vrot.slane %v1035, 1
        %v1068 = vrot.slane %v1036, 1
        %v1069 = vsel %vm445, %v1067, %v1068
        %v1070 = vrot.slane %v1037, 1
        %v1071 = vrot.slane %v1038, 1
        %v1072 = vsel %vm445, %v1070, %v1071
        %v1073 = vrot.slane %v1039, 1
        %v1074 = vrot.slane %v1040, 1
        %v1075 = vsel %vm445, %v1073, %v1074
        %v1076 = vrot.slane %v1041, 1
        %v1077 = vrot.slane %v1042, 1
        %v1078 = vsel %vm445, %v1076, %v1077
        %v1079 = vrot.slane %v1043, 1
        %v1080 = vrot.slane %v1044, 1
        %v1081 = vsel %vm445, %v1079, %v1080
        %v1082 = vrot.slane %v1045, 1
        %v1083 = vrot.slane %v1046, 1
        %v1084 = vsel %vm445, %v1082, %v1083
        %v1085 = vrot.slane %v1047, 1
        %v1086 = vrot.slane %v1048, 1
        %v1087 = vsel %vm445, %v1085, %v1086
        %v1088 = vrot.slane %v1049, 1
        %v1089 = vrot.slane %v1050, 1
        %v1090 = vsel %vm445, %v1088, %v1089
        %v1099 = vadd.f32 %v1026, %v1069
        %v1100 = vadd.f32 %v1027, %v1072
        %v1101 = vadd.f32 %v1028, %v1075
        %v1102 = vadd.f32 %v1029, %v1078
        %v1103 = vadd.f32 %v1030, %v1081
        %v1104 = vadd.f32 %v1031, %v1084
        %v1105 = vadd.f32 %v1032, %v1087
        %v1106 = vadd.f32 %v1033, %v1090
        %v1107 = vperm.slane %v1011, 2
        %v1108 = vmul.f32 %v369, %v1107
        %v1109 = vmul.f32 %v370, %v1107
        %v1110 = vmul.f32 %v371, %v1107
        %v1111 = vmul.f32 %v372, %v1107
        %v1112 = vmul.f32 %v373, %v1107
        %v1113 = vmul.f32 %v374, %v1107
        %v1114 = vmul.f32 %v375, %v1107
        %v1115 = vmul.f32 %v376, %v1107
        %v1116 = vmul.f32 %v377, %v1107
        %v1117 = vmul.f32 %v378, %v1107
        %v1118 = vmul.f32 %v379, %v1107
        %v1119 = vmul.f32 %v380, %v1107
        %v1120 = vmul.f32 %v381, %v1107
        %v1121 = vmul.f32 %v382, %v1107
        %v1122 = vmul.f32 %v383, %v1107
        %v1123 = vmul.f32 %v384, %v1107
        %v1140 = vrot.slane %v1108, 2
        %v1141 = vrot.slane %v1109, 2
        %v1142 = vsel %vm519, %v1140, %v1141
        %v1143 = vrot.slane %v1110, 2
        %v1144 = vrot.slane %v1111, 2
        %v1145 = vsel %vm519, %v1143, %v1144
        %v1146 = vrot.slane %v1112, 2
        %v1147 = vrot.slane %v1113, 2
        %v1148 = vsel %vm519, %v1146, %v1147
        %v1149 = vrot.slane %v1114, 2
        %v1150 = vrot.slane %v1115, 2
        %v1151 = vsel %vm519, %v1149, %v1150
        %v1152 = vrot.slane %v1116, 2
        %v1153 = vrot.slane %v1117, 2
        %v1154 = vsel %vm519, %v1152, %v1153
        %v1155 = vrot.slane %v1118, 2
        %v1156 = vrot.slane %v1119, 2
        %v1157 = vsel %vm519, %v1155, %v1156
        %v1158 = vrot.slane %v1120, 2
        %v1159 = vrot.slane %v1121, 2
        %v1160 = vsel %vm519, %v1158, %v1159
        %v1161 = vrot.slane %v1122, 2
        %v1162 = vrot.slane %v1123, 2
        %v1163 = vsel %vm519, %v1161, %v1162
        %v1172 = vadd.f32 %v1099, %v1142
        %v1173 = vadd.f32 %v1100, %v1145
        %v1174 = vadd.f32 %v1101, %v1148
        %v1175 = vadd.f32 %v1102, %v1151
        %v1176 = vadd.f32 %v1103, %v1154
        %v1177 = vadd.f32 %v1104, %v1157
        %v1178 = vadd.f32 %v1105, %v1160
        %v1179 = vadd.f32 %v1106, %v1163
        %v1180 = vperm.slane %v1011, 3
        %v1181 = vmul.f32 %v371, %v1180
        %v1182 = vmul.f32 %v373, %v1180
        %v1183 = vmul.f32 %v375, %v1180
        %v1184 = vmul.f32 %v377, %v1180
        %v1185 = vmul.f32 %v379, %v1180
        %v1186 = vmul.f32 %v381, %v1180
        %v1187 = vmul.f32 %v383, %v1180
        %v1188 = vmul.f32 %v385, %v1180
        %v1189 = vadd.f32 %v1172, %v1181
        %v1190 = vadd.f32 %v1173, %v1182
        %v1191 = vadd.f32 %v1174, %v1183
        %v1192 = vadd.f32 %v1175, %v1184
        %v1193 = vadd.f32 %v1176, %v1185
        %v1194 = vadd.f32 %v1177, %v1186
        %v1195 = vadd.f32 %v1178, %v1187
        %v1196 = vadd.f32 %v1179, %v1188
        %v1197 = vperm.slane %v1011, 4
        %v1198 = vmul.f32 %v371, %v1197
        %v1199 = vmul.f32 %v372, %v1197
        %v1200 = vmul.f32 %v373, %v1197
        %v1201 = vmul.f32 %v374, %v1197
        %v1202 = vmul.f32 %v375, %v1197
        %v1203 = vmul.f32 %v376, %v1197
        %v1204 = vmul.f32 %v377, %v1197
        %v1205 = vmul.f32 %v378, %v1197
        %v1206 = vmul.f32 %v379, %v1197
        %v1207 = vmul.f32 %v380, %v1197
        %v1208 = vmul.f32 %v381, %v1197
        %v1209 = vmul.f32 %v382, %v1197
        %v1210 = vmul.f32 %v383, %v1197
        %v1211 = vmul.f32 %v384, %v1197
        %v1212 = vmul.f32 %v385, %v1197
        %v1213 = vmul.f32 %v386, %v1197
        %v1230 = vrot.slane %v1198, 1
        %v1231 = vrot.slane %v1199, 1
        %v1232 = vsel %vm445, %v1230, %v1231
        %v1233 = vrot.slane %v1200, 1
        %v1234 = vrot.slane %v1201, 1
        %v1235 = vsel %vm445, %v1233, %v1234
        %v1236 = vrot.slane %v1202, 1
        %v1237 = vrot.slane %v1203, 1
        %v1238 = vsel %vm445, %v1236, %v1237
        %v1239 = vrot.slane %v1204, 1
        %v1240 = vrot.slane %v1205, 1
        %v1241 = vsel %vm445, %v1239, %v1240
        %v1242 = vrot.slane %v1206, 1
        %v1243 = vrot.slane %v1207, 1
        %v1244 = vsel %vm445, %v1242, %v1243
        %v1245 = vrot.slane %v1208, 1
        %v1246 = vrot.slane %v1209, 1
        %v1247 = vsel %vm445, %v1245, %v1246
        %v1248 = vrot.slane %v1210, 1
        %v1249 = vrot.slane %v1211, 1
        %v1250 = vsel %vm445, %v1248, %v1249
        %v1251 = vrot.slane %v1212, 1
        %v1252 = vrot.slane %v1213, 1
        %v1253 = vsel %vm445, %v1251, %v1252
        %v1262 = vadd.f32 %v1189, %v1232
        %v1263 = vadd.f32 %v1190, %v1235
        %v1264 = vadd.f32 %v1191, %v1238
        %v1265 = vadd.f32 %v1192, %v1241
        %v1266 = vadd.f32 %v1193, %v1244
        %v1267 = vadd.f32 %v1194, %v1247
        %v1268 = vadd.f32 %v1195, %v1250
        %v1269 = vadd.f32 %v1196, %v1253
        %v1270 = vperm.slane %v1011, 5
        %v1271 = vmul.f32 %v371, %v1270
        %v1272 = vmul.f32 %v372, %v1270
        %v1273 = vmul.f32 %v373, %v1270
        %v1274 = vmul.f32 %v374, %v1270
        %v1275 = vmul.f32 %v375, %v1270
        %v1276 = vmul.f32 %v376, %v1270
        %v1277 = vmul.f32 %v377, %v1270
        %v1278 = vmul.f32 %v378, %v1270
        %v1279 = vmul.f32 %v379, %v1270
        %v1280 = vmul.f32 %v380, %v1270
        %v1281 = vmul.f32 %v381, %v1270
        %v1282 = vmul.f32 %v382, %v1270
        %v1283 = vmul.f32 %v383, %v1270
        %v1284 = vmul.f32 %v384, %v1270
        %v1285 = vmul.f32 %v385, %v1270
        %v1286 = vmul.f32 %v386, %v1270
        %v1303 = vrot.slane %v1271, 2
        %v1304 = vrot.slane %v1272, 2
        %v1305 = vsel %vm519, %v1303, %v1304
        %v1306 = vrot.slane %v1273, 2
        %v1307 = vrot.slane %v1274, 2
        %v1308 = vsel %vm519, %v1306, %v1307
        %v1309 = vrot.slane %v1275, 2
        %v1310 = vrot.slane %v1276, 2
        %v1311 = vsel %vm519, %v1309, %v1310
        %v1312 = vrot.slane %v1277, 2
        %v1313 = vrot.slane %v1278, 2
        %v1314 = vsel %vm519, %v1312, %v1313
        %v1315 = vrot.slane %v1279, 2
        %v1316 = vrot.slane %v1280, 2
        %v1317 = vsel %vm519, %v1315, %v1316
        %v1318 = vrot.slane %v1281, 2
        %v1319 = vrot.slane %v1282, 2
        %v1320 = vsel %vm519, %v1318, %v1319
        %v1321 = vrot.slane %v1283, 2
        %v1322 = vrot.slane %v1284, 2
        %v1323 = vsel %vm519, %v1321, %v1322
        %v1324 = vrot.slane %v1285, 2
        %v1325 = vrot.slane %v1286, 2
        %v1326 = vsel %vm519, %v1324, %v1325
        %v1335 = vadd.f32 %v1262, %v1305
        %v1336 = vadd.f32 %v1263, %v1308
        %v1337 = vadd.f32 %v1264, %v1311
        %v1338 = vadd.f32 %v1265, %v1314
        %v1339 = vadd.f32 %v1266, %v1317
        %v1340 = vadd.f32 %v1267, %v1320
        %v1341 = vadd.f32 %v1268, %v1323
        %v1342 = vadd.f32 %v1269, %v1326
        %v1343 = vperm.slane %v1011, 6
        %v1344 = vmul.f32 %v373, %v1343
        %v1345 = vmul.f32 %v375, %v1343
        %v1346 = vmul.f32 %v377, %v1343
        %v1347 = vmul.f32 %v379, %v1343
        %v1348 = vmul.f32 %v381, %v1343
        %v1349 = vmul.f32 %v383, %v1343
        %v1350 = vmul.f32 %v385, %v1343
        %v1351 = vmul.f32 %v387, %v1343
        %v1352 = vadd.f32 %v1335, %v1344
        %v1353 = vadd.f32 %v1336, %v1345
        %v1354 = vadd.f32 %v1337, %v1346
        %v1355 = vadd.f32 %v1338, %v1347
        %v1356 = vadd.f32 %v1339, %v1348
        %v1357 = vadd.f32 %v1340, %v1349
        %v1358 = vadd.f32 %v1341, %v1350
        %v1359 = vadd.f32 %v1342, %v1351
        %v1360 = vperm.slane %v1011, 7
        %v1361 = vmul.f32 %v373, %v1360
        %v1362 = vmul.f32 %v374, %v1360
        %v1363 = vmul.f32 %v375, %v1360
        %v1364 = vmul.f32 %v376, %v1360
        %v1365 = vmul.f32 %v377, %v1360
        %v1366 = vmul.f32 %v378, %v1360
        %v1367 = vmul.f32 %v379, %v1360
        %v1368 = vmul.f32 %v380, %v1360
        %v1369 = vmul.f32 %v381, %v1360
        %v1370 = vmul.f32 %v382, %v1360
        %v1371 = vmul.f32 %v383, %v1360
        %v1372 = vmul.f32 %v384, %v1360
        %v1373 = vmul.f32 %v385, %v1360
        %v1374 = vmul.f32 %v386, %v1360
        %v1375 = vmul.f32 %v387, %v1360
        %v1376 = vmul.f32 %v388, %v1360
        %v1393 = vrot.slane %v1361, 1
        %v1394 = vrot.slane %v1362, 1
        %v1395 = vsel %vm445, %v1393, %v1394
        %v1396 = vrot.slane %v1363, 1
        %v1397 = vrot.slane %v1364, 1
        %v1398 = vsel %vm445, %v1396, %v1397
        %v1399 = vrot.slane %v1365, 1
        %v1400 = vrot.slane %v1366, 1
        %v1401 = vsel %vm445, %v1399, %v1400
        %v1402 = vrot.slane %v1367, 1
        %v1403 = vrot.slane %v1368, 1
        %v1404 = vsel %vm445, %v1402, %v1403
        %v1405 = vrot.slane %v1369, 1
        %v1406 = vrot.slane %v1370, 1
        %v1407 = vsel %vm445, %v1405, %v1406
        %v1408 = vrot.slane %v1371, 1
        %v1409 = vrot.slane %v1372, 1
        %v1410 = vsel %vm445, %v1408, %v1409
        %v1411 = vrot.slane %v1373, 1
        %v1412 = vrot.slane %v1374, 1
        %v1413 = vsel %vm445, %v1411, %v1412
        %v1414 = vrot.slane %v1375, 1
        %v1415 = vrot.slane %v1376, 1
        %v1416 = vsel %vm445, %v1414, %v1415
        %v1425 = vadd.f32 %v1352, %v1395
        %v1426 = vadd.f32 %v1353, %v1398
        %v1427 = vadd.f32 %v1354, %v1401
        %v1428 = vadd.f32 %v1355, %v1404
        %v1429 = vadd.f32 %v1356, %v1407
        %v1430 = vadd.f32 %v1357, %v1410
        %v1431 = vadd.f32 %v1358, %v1413
        %v1432 = vadd.f32 %v1359, %v1416
        %v1433 = vperm.slane %v1012, 0
        %v1434 = vmul.f32 %v373, %v1433
        %v1435 = vmul.f32 %v374, %v1433
        %v1436 = vmul.f32 %v375, %v1433
        %v1437 = vmul.f32 %v376, %v1433
        %v1438 = vmul.f32 %v377, %v1433
        %v1439 = vmul.f32 %v378, %v1433
        %v1440 = vmul.f32 %v379, %v1433
        %v1441 = vmul.f32 %v380, %v1433
        %v1442 = vmul.f32 %v381, %v1433
        %v1443 = vmul.f32 %v382, %v1433
        %v1444 = vmul.f32 %v383, %v1433
        %v1445 = vmul.f32 %v384, %v1433
        %v1446 = vmul.f32 %v385, %v1433
        %v1447 = vmul.f32 %v386, %v1433
        %v1448 = vmul.f32 %v387, %v1433
        %v1449 = vmul.f32 %v388, %v1433
        %v1466 = vrot.slane %v1434, 2
        %v1467 = vrot.slane %v1435, 2
        %v1468 = vsel %vm519, %v1466, %v1467
        %v1469 = vrot.slane %v1436, 2
        %v1470 = vrot.slane %v1437, 2
        %v1471 = vsel %vm519, %v1469, %v1470
        %v1472 = vrot.slane %v1438, 2
        %v1473 = vrot.slane %v1439, 2
        %v1474 = vsel %vm519, %v1472, %v1473
        %v1475 = vrot.slane %v1440, 2
        %v1476 = vrot.slane %v1441, 2
        %v1477 = vsel %vm519, %v1475, %v1476
        %v1478 = vrot.slane %v1442, 2
        %v1479 = vrot.slane %v1443, 2
        %v1480 = vsel %vm519, %v1478, %v1479
        %v1481 = vrot.slane %v1444, 2
        %v1482 = vrot.slane %v1445, 2
        %v1483 = vsel %vm519, %v1481, %v1482
        %v1484 = vrot.slane %v1446, 2
        %v1485 = vrot.slane %v1447, 2
        %v1486 = vsel %vm519, %v1484, %v1485
        %v1487 = vrot.slane %v1448, 2
        %v1488 = vrot.slane %v1449, 2
        %v1489 = vsel %vm519, %v1487, %v1488
        %v1498 = vadd.f32 %v1425, %v1468
        %v1499 = vadd.f32 %v1426, %v1471
        %v1500 = vadd.f32 %v1427, %v1474
        %v1501 = vadd.f32 %v1428, %v1477
        %v1502 = vadd.f32 %v1429, %v1480
        %v1503 = vadd.f32 %v1430, %v1483
        %v1504 = vadd.f32 %v1431, %v1486
        %v1505 = vadd.f32 %v1432, %v1489
        %v1506 = vmax.f32 %v1498, 0.0
        %v1507 = vmax.f32 %v1499, 0.0
        %v1508 = vmax.f32 %v1500, 0.0
        %v1509 = vmax.f32 %v1501, 0.0
        %v1510 = vmax.f32 %v1502, 0.0
        %v1511 = vmax.f32 %v1503, 0.0
        %v1512 = vmax.f32 %v1504, 0.0
        %v1513 = vmax.f32 %v1505, 0.0
        %v1514 = vmin.f32 %v1506, 6.0
        %v1515 = vmin.f32 %v1507, 6.0
        %v1516 = vmin.f32 %v1508, 6.0
        %v1517 = vmin.f32 %v1509, 6.0
        %v1518 = vmin.f32 %v1510, 6.0
        %v1519 = vmin.f32 %v1511, 6.0
        %v1520 = vmin.f32 %v1512, 6.0
        %v1521 = vmin.f32 %v1513, 6.0
        %v1522 = vld [vmem:[%s7] sm:$0xff]
        %v1523 = vld [vmem:[%s7 + $0x8] sm:$0xff]
        %v1524 = vld [vmem:[%s7 + $0x10] sm:$0xff]
        %v1525 = vld [vmem:[%s7 + $0x18] sm:$0xff]
        %v1526 = vld [vmem:[%s7 + $0x20] sm:$0xff]
        %v1527 = vld [vmem:[%s7 + $0x28] sm:$0xff]
        %v1528 = vld [vmem:[%s7 + $0x30] sm:$0xff]
        %v1529 = vld [vmem:[%s7 + $0x38] sm:$0xff]
        %v1530 = vld [vmem:[%s7 + $0x40] sm:$0xff]
        %v1531 = vld [vmem:[%s7 + $0x48] sm:$0xff]
        %v1532 = vld [vmem:[%s7 + $0x50] sm:$0xff]
        %v1533 = vld [vmem:[%s7 + $0x58] sm:$0xff]
        %v1534 = vld [vmem:[%s7 + $0x60] sm:$0xff]
        %v1535 = vld [vmem:[%s7 + $0x68] sm:$0xff]
        %v1536 = vld [vmem:[%s7 + $0x70] sm:$0xff]
        %v1537 = vld [vmem:[%s7 + $0x78] sm:$0xff]
        %v1538 = vld [vmem:[%s8] sm:$0x1]
        %v1540 = vperm.slane %v1538, 0
        %1542 = vmatpush.msra.mxu0 %v1537
        %1543 = vmatpush.msra.mxu0 %v1536
        %1544 = vmatpush.msra.mxu0 %v1535
        %1545 = vmatpush.msra.mxu0 %v1534
        %1546 = vmatpush.msra.mxu0 %v1533
        %1547 = vmatpush.msra.mxu0 %v1532
        %1548 = vmatpush.msra.mxu0 %v1531
        %1549 = vmatpush.msra.mxu0 %v1530
        %1550 = vmatpush.msra.mxu0 %v1529
        %1551 = vmatpush.msra.mxu0 %v1528
        %1552 = vmatpush.msra.mxu0 %v1527
        %1553 = vmatpush.msra.mxu0 %v1526
        %1554 = vmatpush.msra.mxu0 %v1525
        %1555 = vmatpush.msra.mxu0 %v1524
        %1556 = vmatpush.msra.mxu0 %v1523
        %1557 = vmatpush.msra.mxu0 %v1522
        %1558 = vmatmul.f32.gmra.mxu0 %v1514
        %v1559 = vpop.f32.mrf.mxu0
        %v1560 = vadd.f32 %v1540, %v1559
        %1561 = vmatmul.f32.gmra.mxu0 %v1515
        %v1562 = vpop.f32.mrf.mxu0
        %v1563 = vadd.f32 %v1540, %v1562
        %1564 = vmatmul.f32.gmra.mxu0 %v1516
        %v1565 = vpop.f32.mrf.mxu0
        %v1566 = vadd.f32 %v1540, %v1565
        %1567 = vmatmul.f32.gmra.mxu0 %v1517
        %v1568 = vpop.f32.mrf.mxu0
        %v1569 = vadd.f32 %v1540, %v1568
        %1570 = vmatmul.f32.gmra.mxu0 %v1518
        %v1571 = vpop.f32.mrf.mxu0
        %v1572 = vadd.f32 %v1540, %v1571
        %1573 = vmatmul.f32.gmra.mxu0 %v1519
        %v1574 = vpop.f32.mrf.mxu0
        %v1575 = vadd.f32 %v1540, %v1574
        %1576 = vmatmul.f32.gmra.mxu0 %v1520
        %v1577 = vpop.f32.mrf.mxu0
        %v1578 = vadd.f32 %v1540, %v1577
        %1579 = vmatmul.f32.gmra.mxu0 %v1521
        %v1580 = vpop.f32.mrf.mxu0
        %v1581 = vadd.f32 %v1540, %v1580
        %1582 = vdwg.mxu0
        %1583 = vst [vmem:[%s363] sm:$0xff] %v1560
        %1584 = vst [vmem:[%s363 + $0x8] sm:$0xff] %v1563
        %1585 = vst [vmem:[%s363 + $0x10] sm:$0xff] %v1566
        %1586 = vst [vmem:[%s363 + $0x18] sm:$0xff] %v1569
        %1587 = vst [vmem:[%s363 + $0x20] sm:$0xff] %v1572
        %1588 = vst [vmem:[%s363 + $0x28] sm:$0xff] %v1575
        %1589 = vst [vmem:[%s363 + $0x30] sm:$0xff] %v1578
        %1590 = vst [vmem:[%s363 + $0x38] sm:$0xff] %v1581
        %s1591 = sand.u32 %s230, 1
        %s1592 = scalar_lea.sflag [#allocation3], %s1591
        %s1593 = sand.u32 %s230, 1
        %s1594 = smul.addr %s1593, 64
        %s1595 = scalar_lea.vmem [#allocation2], %s1594
        %s1596 = sand.u32 %s256, 1
        %s1597 = scalar_lea.sflag [#allocation5], %s1596
        %s1598 = sand.u32 %s256, 1
        %s1599 = smul.addr %s1598, 64
        %s1600 = scalar_lea.vmem [#allocation4], %s1599
        // Predicated region
        $region57: #{tpu_custom_call.1} parent=55 // pred_check
          %p1601 = pneg %p240
        $region58: #{tpu_custom_call.1} parent=55 // pred_check_branch
          %1603 = sbr.rel (%p1601) target = $region60
        $region59: #{tpu_custom_call.1} parent=55 // pred_region
          %1605 = vsyncadd %s1592, 0
          %s1606 = smul.addr %s28, 8
          %s1607 = smul.addr %s1606, 8
          %s1608 = scalar_lea.hbm %s9, %s1607
          %s1609 = sshll.u32 %s1595, 4
          %s1610 = int_to_ptr.vmem [resolvable:$true] %s1609
          %s1611 = sshll.u32 %s1608, 4
          %s1612 = int_to_ptr.hbm [resolvable:$true] %s1611
          %1617 = dma.vmem_to_hbm [thread:$0]  %s1610, 1024, %s1612, %s1592, 128, 128, 8
        $region60: #{tpu_custom_call.1} parent=55 // pred_fallthru
          _
        // Predicated region
        $region61: #{tpu_custom_call.1} parent=55 // pred_check
          %p1618 = pneg %p266
        $region62: #{tpu_custom_call.1} parent=55 // pred_check_branch
          %1620 = sbr.rel (%p1618) target = $region64
        $region63: #{tpu_custom_call.1} parent=55 // pred_region
          %1622 = vsyncadd %s1597, 0
          %s1623 = smul.addr %s28, 8
          %s1624 = smul.addr %s1623, 8
          %s1625 = scalar_lea.hbm %s10, %s1624
          %s1626 = sshll.u32 %s1600, 4
          %s1627 = int_to_ptr.vmem [resolvable:$true] %s1626
          %s1628 = sshll.u32 %s1625, 4
          %s1629 = int_to_ptr.hbm [resolvable:$true] %s1628
          %1634 = dma.vmem_to_hbm [thread:$0]  %s1627, 1024, %s1629, %s1597, 128, 128, 8
        $region64: #{tpu_custom_call.1} parent=55 // pred_fallthru
          _
      $region56: #{tpu_custom_call.1} parent=5 // pred_fallthru
        _
      %p1635 = scmp.le.s32.totalorder 2, %s23
      // Predicated region
      $region65: #{tpu_custom_call.1} parent=5 // pred_check
        %p1636 = pneg %p1635
      $region66: #{tpu_custom_call.1} parent=5 // pred_check_branch
        %1638 = sbr.rel (%p1636) target = $region68
      $region67: #{tpu_custom_call.1} parent=5 // pred_region
        %s1639 = ssub.s32 %s23, 2
        // Predicated region
        $region69: #{tpu_custom_call.1} parent=67 // pred_check
          %p1640 = pneg %p246
        $region70: #{tpu_custom_call.1} parent=67 // pred_check_branch
          %1642 = sbr.rel (%p1640) target = $region72
        $region71: #{tpu_custom_call.1} parent=67 // pred_region
          %s1643 = sand.u32 %s231, 1
          %s1644 = scalar_lea.sflag [#allocation3], %s1643
          %s1645 = sand.u32 %s231, 1
          %s1646 = smul.addr %s1645, 64
          %s1647 = scalar_lea.vmem [#allocation2], %s1646
          %1649 = dma.done %s1644, 1024
        $region72: #{tpu_custom_call.1} parent=67 // pred_fallthru
          _
        // Predicated region
        $region73: #{tpu_custom_call.1} parent=67 // pred_check
          %p1650 = pneg %p272
        $region74: #{tpu_custom_call.1} parent=67 // pred_check_branch
          %1652 = sbr.rel (%p1650) target = $region76
        $region75: #{tpu_custom_call.1} parent=67 // pred_region
          %s1653 = sand.u32 %s257, 1
          %s1654 = scalar_lea.sflag [#allocation5], %s1653
          %s1655 = sand.u32 %s257, 1
          %s1656 = smul.addr %s1655, 64
          %s1657 = scalar_lea.vmem [#allocation4], %s1656
          %1659 = dma.done %s1654, 1024
        $region76: #{tpu_custom_call.1} parent=67 // pred_fallthru
          _
      $region68: #{tpu_custom_call.1} parent=5 // pred_fallthru
        _
    $region6: #{tpu_custom_call.1} parent=1 // loop_footer
      %s27 = sadd.s32 1, %s23
    $region7: #{tpu_custom_call.1} parent=1 // loop_footer_branch
      %22 = sbr.rel target = $region3
    $region8: #{tpu_custom_call.1} parent=1 // loop_exit
      _
    %1660 = vsyncpa [#allocation3], 1
    %s1661 = scalar_lea.sflag [#allocation3], 1
    %1662 = vsyncpa %s1661, 1
    %1663 = vsyncpa [#allocation5], 1
    %s1664 = scalar_lea.sflag [#allocation5], 1
    %1665 = vsyncpa %s1664, 1

</llo_original>
